<compile_context>
chip_gen: v5e
topology: v5e:2x2
jax: 0.10.0
libtpu: 0.0.40
codegen_flags: <defaults>
</compile_context>

<pallas_src>
import functools

import jax
import jax.numpy as jnp
from jax.experimental import pallas as pl
from jax.experimental.pallas import tpu as pltpu


def _vmem_limit_bytes():
    # ~85% of physical VMEM: ~108 MiB on v5e/v6e (128 MiB parts), ~54 MiB on v7x
    # (64 MiB per TC), leaving headroom for double-buffered tiles + internal scratch.
    try:
        cap = pltpu.get_tpu_info().vmem_capacity_bytes
        return int(cap * 0.85)
    except Exception:
        return 64 * 1024 * 1024          # conservative fallback, safe on all gens


VMEM_LIMIT_BYTES = _vmem_limit_bytes()


def _layernorm(x, w, b, eps=1e-5):
    mu = jnp.mean(x, axis=-1, keepdims=True)
    var = jnp.mean((x - mu) ** 2, axis=-1, keepdims=True)
    return (x - mu) * jax.lax.rsqrt(var + eps) * w + b


# ---------------------------------------------------------------------------
# All transformer Blocks fused into one kernel: grid = (batch, layer).
# ---------------------------------------------------------------------------
def blocks_kernel(num_heads, q_tile, ffn_tile,
                  x_ref, ln1w_ref, ln1b_ref, wk_ref, wp_ref, bp_ref,
                  ln2w_ref, ln2b_ref, w1_ref, b1_ref, w2_ref, b2_ref,
                  o_ref):
    layer = pl.program_id(1)

    @pl.when(layer == 0)
    def _():                               # seed the VMEM-resident activation carry
        o_ref[...] = x_ref[...]

    x = o_ref[...]                         # (T, C) f32, carried across the layer loop
    T, C = x.shape
    H = num_heads
    scale = C ** (-0.5)                    # reference scales by n_embed, not head_size

    # ---- multi-head self-attention on layer_norm1(x) ----
    h = _layernorm(x, ln1w_ref[...], ln1b_ref[...])
    hbf = jnp.broadcast_to(h.astype(jnp.bfloat16), (H, T, C))
    # Reference bug reproduced exactly: q = k = v = key(x).  Head-major weights make
    # the output head-blocked directly (no lane-offset slices / XLU relayouts).
    kv = jnp.einsum("htc,hcd->htd", hbf, wk_ref[...],
                    preferred_element_type=jnp.float32)            # (H, T, hs) f32
    kv_bf = kv.astype(jnp.bfloat16)
    wp_all = wp_ref[...]                                           # (H, hs, C) bf16

    # Query-tiled attention: score memory bounded to (H, tq, T) f32 instead of
    # (H, T, T); K/V are already VMEM-resident so no online softmax is needed.
    attn_rows = []
    for q0 in range(0, T, q_tile):
        tq = min(q_tile, T - q0)
        q_bf = kv_bf[:, q0:q0 + tq, :]                             # (H, tq, hs)
        s = jnp.einsum("hqd,hkd->hqk", q_bf, kv_bf,
                       preferred_element_type=jnp.float32) * scale # (H, tq, T)
        row = q0 + jax.lax.broadcasted_iota(jnp.int32, (tq, T), 0)
        col = jax.lax.broadcasted_iota(jnp.int32, (tq, T), 1)
        s = s + jnp.where(row >= col, 0.0, -1e30)[None, :, :]      # causal (decoder)
        s = s - jnp.max(s, axis=-1, keepdims=True)
        e = jnp.exp(s)
        p = e / jnp.sum(e, axis=-1, keepdims=True)                 # exact softmax
        # dropout on attention probs: eval-mode identity
        o_h = jnp.einsum("hqk,hkd->hqd", p.astype(jnp.bfloat16), kv_bf,
                         preferred_element_type=jnp.float32)       # (H, tq, hs)
        # Head merge + output projection without concat / masked partial stores:
        #   sum_h o_h[h] @ wp[h]  ==  concat_h(o_h) @ Wp
        pr = jnp.einsum("hqd,hdc->hqc", o_h.astype(jnp.bfloat16), wp_all,
                        preferred_element_type=jnp.float32)        # (H, tq, C)
        attn_rows.append(jnp.sum(pr, axis=0))
    attn = attn_rows[0] if len(attn_rows) == 1 else jnp.concatenate(attn_rows, axis=0)
    # dropout: eval-mode identity
    x = x + attn + bp_ref[...]

    # ---- feed-forward on layer_norm2(x), tiled over the 4C hidden dim ----
    h2 = _layernorm(x, ln2w_ref[...], ln2b_ref[...]).astype(jnp.bfloat16)
    F4 = w1_ref.shape[-1]
    y = jnp.zeros((T, C), jnp.float32)
    for f0 in range(0, F4, ffn_tile):
        tf = min(ffn_tile, F4 - f0)
        f = jnp.maximum(
            jnp.dot(h2, w1_ref[:, f0:f0 + tf],
                    preferred_element_type=jnp.float32) + b1_ref[:, f0:f0 + tf],
            0.0)
        y = y + jnp.dot(f.astype(jnp.bfloat16), w2_ref[f0:f0 + tf, :],
                        preferred_element_type=jnp.float32)
    # dropout: eval-mode identity
    o_ref[...] = x + y + b2_ref[...]


def run_blocks(x, stacked, num_heads, *, q_tile=256, ffn_tile=2048):
    B, T, C = x.shape
    L = stacked[0].shape[0]
    q_tile = min(q_tile, T)
    ffn_tile = min(ffn_tile, 4 * C)
    in_specs = [pl.BlockSpec((None, T, C), lambda b, l: (b, 0, 0))]
    for p in stacked:   # per-layer weight: leading layer dim indexed by grid axis 1
        in_specs.append(
            pl.BlockSpec((None,) + p.shape[1:],
                         lambda b, l, _n=p.ndim: (l,) + (0,) * (_n - 1)))
    return pl.pallas_call(
        functools.partial(blocks_kernel, num_heads, q_tile, ffn_tile),
        out_shape=jax.ShapeDtypeStruct((B, T, C), jnp.float32),
        grid=(B, L),
        in_specs=in_specs,
        out_specs=pl.BlockSpec((None, T, C), lambda b, l: (b, 0, 0)),
        compiler_params=pltpu.CompilerParams(
            dimension_semantics=("parallel", "arbitrary"),   # x resident over layers
            vmem_limit_bytes=VMEM_LIMIT_BYTES),
    )(x, *stacked)


# ---------------------------------------------------------------------------
# Final LM head: logits = x @ W_lm + b_lm, tiled over (batch, vocab, seq) with the
# seq tile innermost so the (C, TV) weight tile is NOT re-streamed per seq tile.
# ---------------------------------------------------------------------------
def logits_kernel(x_ref, wl_ref, bl_ref, o_ref):
    o_ref[...] = (jnp.dot(x_ref[...].astype(jnp.bfloat16), wl_ref[...],
                          preferred_element_type=jnp.float32) + bl_ref[...])


def run_logits(x, wl, bl, *, tile_t=512, tile_v=4096):
    B, T, C = x.shape
    V = wl.shape[1]
    TT = T if T <= tile_t else tile_t          # full dim, or (8,128)-aligned tile
    TV = V if V <= tile_v else tile_v
    grid = (B, pl.cdiv(V, TV), pl.cdiv(T, TT))
    # TODO(synk): emit bf16 logits or fuse log-softmax/cross-entropy here to halve
    # the (B,T,V) HBM writeback; kept f32 to match the reference output dtype.
    return pl.pallas_call(
        logits_kernel,
        out_shape=jax.ShapeDtypeStruct((B, T, V), jnp.float32),
        grid=grid,
        in_specs=[pl.BlockSpec((None, TT, C), lambda b, v, t: (b, t, 0)),
                  pl.BlockSpec((C, TV), lambda b, v, t: (0, v)),
                  pl.BlockSpec((1, TV), lambda b, v, t: (0, v))],
        out_specs=pl.BlockSpec((None, TT, TV), lambda b, v, t: (b, t, v)),
        compiler_params=pltpu.CompilerParams(
            dimension_semantics=("parallel", "parallel", "arbitrary"),
            vmem_limit_bytes=VMEM_LIMIT_BYTES),
    )(x, wl, bl)


# ---------------------------------------------------------------------------
# Parameter init (deterministic, synthetic) and full forward
# ---------------------------------------------------------------------------
def init_params(key, vocab_size, n_blocks, n_embed, num_heads, block_size):
    C, H, L = n_embed, num_heads, n_blocks
    hs = C // H
    keys = jax.random.split(key, 9)
    nrm = lambda k, shp, dt: (0.02 * jax.random.normal(k, shp)).astype(dt)
    return {
        "tok_emb": nrm(keys[0], (vocab_size, C), jnp.float32),
        "pos_emb": nrm(keys[1], (block_size, C), jnp.float32),
        "lm_w": nrm(keys[2], (C, vocab_size), jnp.bfloat16),       # (in, out)
        "lm_b": nrm(keys[3], (1, vocab_size), jnp.float32),
        "blocks": [                                                 # stacked over layers
            jnp.ones((L, 1, C), jnp.float32),                       # ln1 weight
            jnp.zeros((L, 1, C), jnp.float32),                      # ln1 bias
            nrm(keys[4], (L, H, C, hs), jnp.bfloat16),              # per-head key W (q=k=v)
            nrm(keys[5], (L, H, hs, C), jnp.bfloat16),              # head-major proj W
            jnp.zeros((L, 1, C), jnp.float32),                      # proj bias
            jnp.ones((L, 1, C), jnp.float32),                       # ln2 weight
            jnp.zeros((L, 1, C), jnp.float32),                      # ln2 bias
            nrm(keys[6], (L, C, 4 * C), jnp.bfloat16),              # ffn W1 (in, out)
            nrm(keys[7], (L, 1, 4 * C), jnp.float32),               # ffn b1
            nrm(keys[8], (L, 4 * C, C), jnp.bfloat16),              # ffn W2 (in, out)
            jnp.zeros((L, 1, C), jnp.float32),                      # ffn b2
        ],
    }


def language_model_forward(params, idx, num_heads):
    # Embedding gathers are glue; all matmul / attention / layernorm / ffn hot-path
    # compute happens inside the Pallas kernels above.
    B, T = idx.shape
    tokens = jnp.take(params["tok_emb"], idx, axis=0)               # (B, T, C)
    positions = params["pos_emb"][:T]                               # (T, C)
    x = (tokens + positions[None, :, :]).astype(jnp.float32)
    x = run_blocks(x, params["blocks"], num_heads)                  # all layers, one kernel
    logits = run_logits(x, params["lm_w"], params["lm_b"])          # (B, T, vocab)
    loss = None  # targets=None path of the reference
    # TODO(synk): cross-entropy loss (targets != None path) and multinomial sampling
    # in generate_sequence are not implemented as Pallas kernels.
    return logits, loss


if __name__ == "__main__":
    vocab_size, n_blocks, n_embed, num_heads, block_size = 64, 2, 32, 4, 8
    B, T = 2, 8

    key = jax.random.PRNGKey(0)
    pkey, ikey = jax.random.split(key)
    params = init_params(pkey, vocab_size, n_blocks, n_embed, num_heads, block_size)
    idx = jax.random.randint(ikey, (B, T), 0, vocab_size, dtype=jnp.int32)

    logits, loss = language_model_forward(params, idx, num_heads)
    jax.block_until_ready(logits)
    assert logits.shape == (B, T, vocab_size)
    print("KERNEL_OK")
</pallas_src>

<mosaic_0001>
module attributes {stable_mosaic.version = 11 : i64} {
  func.func @blocks_kernel(%arg0: i32, %arg1: i32, %arg2: memref<1x8x32xf32, #tpu.memory_space<vmem>>, %arg3: memref<1x1x32xf32, #tpu.memory_space<vmem>>, %arg4: memref<1x1x32xf32, #tpu.memory_space<vmem>>, %arg5: memref<1x4x32x8xbf16, #tpu.memory_space<vmem>>, %arg6: memref<1x4x8x32xbf16, #tpu.memory_space<vmem>>, %arg7: memref<1x1x32xf32, #tpu.memory_space<vmem>>, %arg8: memref<1x1x32xf32, #tpu.memory_space<vmem>>, %arg9: memref<1x1x32xf32, #tpu.memory_space<vmem>>, %arg10: memref<1x32x128xbf16, #tpu.memory_space<vmem>>, %arg11: memref<1x1x128xf32, #tpu.memory_space<vmem>>, %arg12: memref<1x128x32xbf16, #tpu.memory_space<vmem>>, %arg13: memref<1x1x32xf32, #tpu.memory_space<vmem>>, %arg14: memref<1x8x32xf32, #tpu.memory_space<vmem>>) attributes {dimension_semantics = [#tpu.dimension_semantics<parallel>, #tpu.dimension_semantics<arbitrary>], iteration_bounds = array<i64: 2, 2>, scalar_prefetch = 0 : i64, scratch_operands = 0 : i64, tpu.core_type = #tpu.core_type<tc>, window_params = [{transform_indices = @transform_0, window_bounds = array<i64: 1, 8, 32>}, {transform_indices = @transform_1, window_bounds = array<i64: 1, 1, 32>}, {transform_indices = @transform_2, window_bounds = array<i64: 1, 1, 32>}, {transform_indices = @transform_3, window_bounds = array<i64: 1, 4, 32, 8>}, {transform_indices = @transform_4, window_bounds = array<i64: 1, 4, 8, 32>}, {transform_indices = @transform_5, window_bounds = array<i64: 1, 1, 32>}, {transform_indices = @transform_6, window_bounds = array<i64: 1, 1, 32>}, {transform_indices = @transform_7, window_bounds = array<i64: 1, 1, 32>}, {transform_indices = @transform_8, window_bounds = array<i64: 1, 32, 128>}, {transform_indices = @transform_9, window_bounds = array<i64: 1, 1, 128>}, {transform_indices = @transform_10, window_bounds = array<i64: 1, 128, 32>}, {transform_indices = @transform_11, window_bounds = array<i64: 1, 1, 32>}, {transform_indices = @transform_12, window_bounds = array<i64: 1, 8, 32>}]} {
    %c0_i32 = arith.constant 0 : i32
    %0 = arith.cmpi eq, %arg1, %c0_i32 : i32
    %1 = arith.extui %0 : i1 to i32
    %c0_i32_0 = arith.constant 0 : i32
    %2 = arith.cmpi ne, %1, %c0_i32_0 : i32
    scf.if %2 {
      %c0_65 = arith.constant 0 : index
      %c0_66 = arith.constant 0 : index
      %c0_67 = arith.constant 0 : index
      %123 = vector.load %arg2[%c0_65, %c0_66, %c0_67] : memref<1x8x32xf32, #tpu.memory_space<vmem>>, vector<1x8x32xf32>
      %124 = vector.shape_cast %123 : vector<1x8x32xf32> to vector<8x32xf32>
      %c0_68 = arith.constant 0 : index
      %c0_69 = arith.constant 0 : index
      %c0_70 = arith.constant 0 : index
      %125 = vector.load %arg14[%c0_68, %c0_69, %c0_70] : memref<1x8x32xf32, #tpu.memory_space<vmem>>, vector<1x8x32xf32>
      %126 = vector.shape_cast %125 : vector<1x8x32xf32> to vector<8x32xf32>
      %127 = vector.shape_cast %124 : vector<8x32xf32> to vector<1x8x32xf32>
      tpu.vector_store %arg14[%c0_68, %c0_69, %c0_70], %127 {strides = array<i32>} : memref<1x8x32xf32, #tpu.memory_space<vmem>>, vector<1x8x32xf32>,
    } else {
    }
    %c0 = arith.constant 0 : index
    %c0_1 = arith.constant 0 : index
    %c0_2 = arith.constant 0 : index
    %3 = vector.load %arg14[%c0, %c0_1, %c0_2] : memref<1x8x32xf32, #tpu.memory_space<vmem>>, vector<1x8x32xf32>
    %4 = vector.shape_cast %3 : vector<1x8x32xf32> to vector<8x32xf32>
    %c0_3 = arith.constant 0 : index
    %c0_4 = arith.constant 0 : index
    %c0_5 = arith.constant 0 : index
    %5 = vector.load %arg3[%c0_3, %c0_4, %c0_5] : memref<1x1x32xf32, #tpu.memory_space<vmem>>, vector<1x1x32xf32>
    %6 = vector.shape_cast %5 : vector<1x1x32xf32> to vector<1x32xf32>
    %c0_6 = arith.constant 0 : index
    %c0_7 = arith.constant 0 : index
    %c0_8 = arith.constant 0 : index
    %7 = vector.load %arg4[%c0_6, %c0_7, %c0_8] : memref<1x1x32xf32, #tpu.memory_space<vmem>>, vector<1x1x32xf32>
    %8 = vector.shape_cast %7 : vector<1x1x32xf32> to vector<1x32xf32>
    %cst = arith.constant dense<0.000000e+00> : vector<8xf32>
    %9 = vector.multi_reduction <add>, %4, %cst [1] : vector<8x32xf32> to vector<8xf32>
    %10 = vector.shape_cast %9 : vector<8xf32> to vector<8x1xf32>
    %cst_9 = arith.constant 3.200000e+01 : f32
    %11 = vector.broadcast %cst_9 : f32 to vector<8x1xf32>
    %12 = arith.divf %10, %11 : vector<8x1xf32>
    %13 = vector.broadcast %12 : vector<8x1xf32> to vector<8x32xf32>
    %14 = arith.subf %4, %13 : vector<8x32xf32>
    %15 = arith.mulf %14, %14 : vector<8x32xf32>
    %cst_10 = arith.constant dense<0.000000e+00> : vector<8xf32>
    %16 = vector.multi_reduction <add>, %15, %cst_10 [1] : vector<8x32xf32> to vector<8xf32>
    %17 = vector.shape_cast %16 : vector<8xf32> to vector<8x1xf32>
    %cst_11 = arith.constant 3.200000e+01 : f32
    %18 = vector.broadcast %cst_11 : f32 to vector<8x1xf32>
    %19 = arith.divf %17, %18 : vector<8x1xf32>
    %20 = vector.broadcast %12 : vector<8x1xf32> to vector<8x32xf32>
    %21 = arith.subf %4, %20 : vector<8x32xf32>
    %cst_12 = arith.constant 9.99999974E-6 : f32
    %22 = vector.broadcast %cst_12 : f32 to vector<8x1xf32>
    %23 = arith.addf %19, %22 : vector<8x1xf32>
    %24 = math.rsqrt %23 : vector<8x1xf32>
    %25 = vector.broadcast %24 : vector<8x1xf32> to vector<8x32xf32>
    %26 = arith.mulf %21, %25 : vector<8x32xf32>
    %27 = vector.broadcast %6 : vector<1x32xf32> to vector<8x32xf32>
    %28 = arith.mulf %26, %27 : vector<8x32xf32>
    %29 = vector.broadcast %8 : vector<1x32xf32> to vector<8x32xf32>
    %30 = arith.addf %28, %29 : vector<8x32xf32>
    %31 = arith.truncf %30 : vector<8x32xf32> to vector<8x32xbf16>
    %32 = vector.shape_cast %31 : vector<8x32xbf16> to vector<1x8x32xbf16>
    %33 = vector.broadcast %32 : vector<1x8x32xbf16> to vector<4x8x32xbf16>
    %c0_13 = arith.constant 0 : index
    %c0_14 = arith.constant 0 : index
    %c0_15 = arith.constant 0 : index
    %c0_16 = arith.constant 0 : index
    %34 = vector.load %arg5[%c0_13, %c0_14, %c0_15, %c0_16] : memref<1x4x32x8xbf16, #tpu.memory_space<vmem>>, vector<1x4x32x8xbf16>
    %35 = vector.shape_cast %34 : vector<1x4x32x8xbf16> to vector<4x32x8xbf16>
    "tpu.trace_start"() <{level = 10 : i32, message = "htc,hcd->htd"}> : () -> ()
    %cst_17 = arith.constant dense<0.000000e+00> : vector<4x8x8xf32>
    %36 = tpu.matmul %33, %35, %cst_17 {dimension_numbers = #tpu.dot_dimension_numbers<[2], [1], [1], [2], [0, 0, 0, 1, 1, 2], [0], [0]>} : vector<4x8x32xbf16>, vector<4x32x8xbf16>, vector<4x8x8xf32> -> vector<4x8x8xf32>
    "tpu.trace_stop"() : () -> ()
    %37 = arith.truncf %36 : vector<4x8x8xf32> to vector<4x8x8xbf16>
    %c0_18 = arith.constant 0 : index
    %c0_19 = arith.constant 0 : index
    %c0_20 = arith.constant 0 : index
    %c0_21 = arith.constant 0 : index
    %38 = vector.load %arg6[%c0_18, %c0_19, %c0_20, %c0_21] : memref<1x4x8x32xbf16, #tpu.memory_space<vmem>>, vector<1x4x8x32xbf16>
    %39 = vector.shape_cast %38 : vector<1x4x8x32xbf16> to vector<4x8x32xbf16>
    "tpu.trace_start"() <{level = 10 : i32, message = "hqd,hkd->hqk"}> : () -> ()
    %cst_22 = arith.constant dense<0.000000e+00> : vector<4x8x8xf32>
    %40 = tpu.matmul %37, %37, %cst_22 {dimension_numbers = #tpu.dot_dimension_numbers<[2], [2], [1], [1], [0, 0, 0, 1, 1, 1], [0], [0]>} : vector<4x8x8xbf16>, vector<4x8x8xbf16>, vector<4x8x8xf32> -> vector<4x8x8xf32>
    "tpu.trace_stop"() : () -> ()
    %cst_23 = arith.constant 0.176776692 : f32
    %41 = vector.broadcast %cst_23 : f32 to vector<4x8x8xf32>
    %42 = arith.mulf %40, %41 : vector<4x8x8xf32>
    %43 = tpu.iota {dimensions = array<i32: 0>} : vector<8x8xi32>
    %c0_i32_24 = arith.constant 0 : i32
    %44 = vector.broadcast %c0_i32_24 : i32 to vector<8x8xi32>
    %45 = arith.addi %44, %43 : vector<8x8xi32>
    %46 = tpu.iota {dimensions = array<i32: 1>} : vector<8x8xi32>
    %47 = arith.cmpi sge, %45, %46 : vector<8x8xi32>
    %cst_25 = arith.constant 0.000000e+00 : f32
    %cst_26 = arith.constant -1.000000e+30 : f32
    %48 = vector.broadcast %cst_25 : f32 to vector<8x8xf32>
    %49 = vector.broadcast %cst_26 : f32 to vector<8x8xf32>
    %50 = arith.select %47, %48, %49 : vector<8x8xi1>, vector<8x8xf32>
    %51 = vector.shape_cast %50 : vector<8x8xf32> to vector<1x8x8xf32>
    %52 = vector.broadcast %51 : vector<1x8x8xf32> to vector<4x8x8xf32>
    %53 = arith.addf %42, %52 : vector<4x8x8xf32>
    %cst_27 = arith.constant dense<0xFF800000> : vector<4x8xf32>
    %54 = vector.multi_reduction <maximumf>, %53, %cst_27 [2] : vector<4x8x8xf32> to vector<4x8xf32>
    %55 = vector.shape_cast %54 : vector<4x8xf32> to vector<4x8x1xf32>
    %56 = vector.broadcast %55 : vector<4x8x1xf32> to vector<4x8x8xf32>
    %57 = arith.subf %53, %56 : vector<4x8x8xf32>
    %58 = math.exp %57 : vector<4x8x8xf32>
    %cst_28 = arith.constant dense<0.000000e+00> : vector<4x8xf32>
    %59 = vector.multi_reduction <add>, %58, %cst_28 [2] : vector<4x8x8xf32> to vector<4x8xf32>
    %60 = vector.shape_cast %59 : vector<4x8xf32> to vector<4x8x1xf32>
    %61 = vector.broadcast %60 : vector<4x8x1xf32> to vector<4x8x8xf32>
    %62 = arith.divf %58, %61 : vector<4x8x8xf32>
    %63 = arith.truncf %62 : vector<4x8x8xf32> to vector<4x8x8xbf16>
    "tpu.trace_start"() <{level = 10 : i32, message = "hqk,hkd->hqd"}> : () -> ()
    %cst_29 = arith.constant dense<0.000000e+00> : vector<4x8x8xf32>
    %64 = tpu.matmul %63, %37, %cst_29 {dimension_numbers = #tpu.dot_dimension_numbers<[2], [1], [1], [2], [0, 0, 0, 1, 1, 2], [0], [0]>} : vector<4x8x8xbf16>, vector<4x8x8xbf16>, vector<4x8x8xf32> -> vector<4x8x8xf32>
    "tpu.trace_stop"() : () -> ()
    %65 = arith.truncf %64 : vector<4x8x8xf32> to vector<4x8x8xbf16>
    "tpu.trace_start"() <{level = 10 : i32, message = "hqd,hdc->hqc"}> : () -> ()
    %cst_30 = arith.constant dense<0.000000e+00> : vector<4x8x32xf32>
    %66 = tpu.matmul %65, %39, %cst_30 {dimension_numbers = #tpu.dot_dimension_numbers<[2], [1], [1], [2], [0, 0, 0, 1, 1, 2], [0], [0]>} : vector<4x8x8xbf16>, vector<4x8x32xbf16>, vector<4x8x32xf32> -> vector<4x8x32xf32>
    "tpu.trace_stop"() : () -> ()
    %cst_31 = arith.constant dense<0.000000e+00> : vector<8x32xf32>
    %67 = vector.multi_reduction <add>, %66, %cst_31 [0] : vector<4x8x32xf32> to vector<8x32xf32>
    %68 = arith.addf %4, %67 : vector<8x32xf32>
    %c0_32 = arith.constant 0 : index
    %c0_33 = arith.constant 0 : index
    %c0_34 = arith.constant 0 : index
    %69 = vector.load %arg7[%c0_32, %c0_33, %c0_34] : memref<1x1x32xf32, #tpu.memory_space<vmem>>, vector<1x1x32xf32>
    %70 = vector.shape_cast %69 : vector<1x1x32xf32> to vector<1x32xf32>
    %71 = vector.broadcast %70 : vector<1x32xf32> to vector<8x32xf32>
    %72 = arith.addf %68, %71 : vector<8x32xf32>
    %c0_35 = arith.constant 0 : index
    %c0_36 = arith.constant 0 : index
    %c0_37 = arith.constant 0 : index
    %73 = vector.load %arg8[%c0_35, %c0_36, %c0_37] : memref<1x1x32xf32, #tpu.memory_space<vmem>>, vector<1x1x32xf32>
    %74 = vector.shape_cast %73 : vector<1x1x32xf32> to vector<1x32xf32>
    %c0_38 = arith.constant 0 : index
    %c0_39 = arith.constant 0 : index
    %c0_40 = arith.constant 0 : index
    %75 = vector.load %arg9[%c0_38, %c0_39, %c0_40] : memref<1x1x32xf32, #tpu.memory_space<vmem>>, vector<1x1x32xf32>
    %76 = vector.shape_cast %75 : vector<1x1x32xf32> to vector<1x32xf32>
    %cst_41 = arith.constant dense<0.000000e+00> : vector<8xf32>
    %77 = vector.multi_reduction <add>, %72, %cst_41 [1] : vector<8x32xf32> to vector<8xf32>
    %78 = vector.shape_cast %77 : vector<8xf32> to vector<8x1xf32>
    %cst_42 = arith.constant 3.200000e+01 : f32
    %79 = vector.broadcast %cst_42 : f32 to vector<8x1xf32>
    %80 = arith.divf %78, %79 : vector<8x1xf32>
    %81 = vector.broadcast %80 : vector<8x1xf32> to vector<8x32xf32>
    %82 = arith.subf %72, %81 : vector<8x32xf32>
    %83 = arith.mulf %82, %82 : vector<8x32xf32>
    %cst_43 = arith.constant dense<0.000000e+00> : vector<8xf32>
    %84 = vector.multi_reduction <add>, %83, %cst_43 [1] : vector<8x32xf32> to vector<8xf32>
    %85 = vector.shape_cast %84 : vector<8xf32> to vector<8x1xf32>
    %cst_44 = arith.constant 3.200000e+01 : f32
    %86 = vector.broadcast %cst_44 : f32 to vector<8x1xf32>
    %87 = arith.divf %85, %86 : vector<8x1xf32>
    %88 = vector.broadcast %80 : vector<8x1xf32> to vector<8x32xf32>
    %89 = arith.subf %72, %88 : vector<8x32xf32>
    %cst_45 = arith.constant 9.99999974E-6 : f32
    %90 = vector.broadcast %cst_45 : f32 to vector<8x1xf32>
    %91 = arith.addf %87, %90 : vector<8x1xf32>
    %92 = math.rsqrt %91 : vector<8x1xf32>
    %93 = vector.broadcast %92 : vector<8x1xf32> to vector<8x32xf32>
    %94 = arith.mulf %89, %93 : vector<8x32xf32>
    %95 = vector.broadcast %74 : vector<1x32xf32> to vector<8x32xf32>
    %96 = arith.mulf %94, %95 : vector<8x32xf32>
    %97 = vector.broadcast %76 : vector<1x32xf32> to vector<8x32xf32>
    %98 = arith.addf %96, %97 : vector<8x32xf32>
    %99 = arith.truncf %98 : vector<8x32xf32> to vector<8x32xbf16>
    %cst_46 = arith.constant 0.000000e+00 : f32
    %100 = vector.broadcast %cst_46 : f32 to vector<8x32xf32>
    %c0_47 = arith.constant 0 : index
    %c0_48 = arith.constant 0 : index
    %c0_49 = arith.constant 0 : index
    %101 = vector.load %arg10[%c0_47, %c0_48, %c0_49] : memref<1x32x128xbf16, #tpu.memory_space<vmem>>, vector<1x32x128xbf16>
    %102 = vector.shape_cast %101 : vector<1x32x128xbf16> to vector<32x128xbf16>
    %cst_50 = arith.constant dense<0.000000e+00> : vector<8x128xf32>
    %103 = tpu.matmul %99, %102, %cst_50 {dimension_numbers = #tpu.dot_dimension_numbers<[1], [0], [0], [1], [0, 0, 1, 1], [], []>} : vector<8x32xbf16>, vector<32x128xbf16>, vector<8x128xf32> -> vector<8x128xf32>
    %c0_51 = arith.constant 0 : index
    %c0_52 = arith.constant 0 : index
    %c0_53 = arith.constant 0 : index
    %104 = vector.load %arg11[%c0_51, %c0_52, %c0_53] : memref<1x1x128xf32, #tpu.memory_space<vmem>>, vector<1x1x128xf32>
    %105 = vector.shape_cast %104 : vector<1x1x128xf32> to vector<1x128xf32>
    %106 = vector.broadcast %105 : vector<1x128xf32> to vector<8x128xf32>
    %107 = arith.addf %103, %106 : vector<8x128xf32>
    %cst_54 = arith.constant 0.000000e+00 : f32
    %108 = vector.broadcast %cst_54 : f32 to vector<8x128xf32>
    %109 = arith.maximumf %107, %108 : vector<8x128xf32>
    %110 = arith.truncf %109 : vector<8x128xf32> to vector<8x128xbf16>
    %c0_55 = arith.constant 0 : index
    %c0_56 = arith.constant 0 : index
    %c0_57 = arith.constant 0 : index
    %111 = vector.load %arg12[%c0_55, %c0_56, %c0_57] : memref<1x128x32xbf16, #tpu.memory_space<vmem>>, vector<1x128x32xbf16>
    %112 = vector.shape_cast %111 : vector<1x128x32xbf16> to vector<128x32xbf16>
    %cst_58 = arith.constant dense<0.000000e+00> : vector<8x32xf32>
    %113 = tpu.matmul %110, %112, %cst_58 {dimension_numbers = #tpu.dot_dimension_numbers<[1], [0], [0], [1], [0, 0, 1, 1], [], []>} : vector<8x128xbf16>, vector<128x32xbf16>, vector<8x32xf32> -> vector<8x32xf32>
    %114 = arith.addf %100, %113 : vector<8x32xf32>
    %115 = arith.addf %72, %114 : vector<8x32xf32>
    %c0_59 = arith.constant 0 : index
    %c0_60 = arith.constant 0 : index
    %c0_61 = arith.constant 0 : index
    %116 = vector.load %arg13[%c0_59, %c0_60, %c0_61] : memref<1x1x32xf32, #tpu.memory_space<vmem>>, vector<1x1x32xf32>
    %117 = vector.shape_cast %116 : vector<1x1x32xf32> to vector<1x32xf32>
    %118 = vector.broadcast %117 : vector<1x32xf32> to vector<8x32xf32>
    %119 = arith.addf %115, %118 : vector<8x32xf32>
    %c0_62 = arith.constant 0 : index
    %c0_63 = arith.constant 0 : index
    %c0_64 = arith.constant 0 : index
    %120 = vector.load %arg14[%c0_62, %c0_63, %c0_64] : memref<1x8x32xf32, #tpu.memory_space<vmem>>, vector<1x8x32xf32>
    %121 = vector.shape_cast %120 : vector<1x8x32xf32> to vector<8x32xf32>
    %122 = vector.shape_cast %119 : vector<8x32xf32> to vector<1x8x32xf32>
    tpu.vector_store %arg14[%c0_62, %c0_63, %c0_64], %122 {strides = array<i32>} : memref<1x8x32xf32, #tpu.memory_space<vmem>>, vector<1x8x32xf32>,
    return
  }
  func.func @transform_0(%arg0: i32, %arg1: i32) -> (i32, i32, i32) {
    %c0_i32 = arith.constant 0 : i32
    %c0_i32_0 = arith.constant 0 : i32
    %c0_i32_1 = arith.constant 0 : i32
    return %arg0, %c0_i32, %c0_i32_0 : i32, i32, i32
  }
  func.func @transform_1(%arg0: i32, %arg1: i32) -> (i32, i32, i32) {
    %c0_i32 = arith.constant 0 : i32
    %c0_i32_0 = arith.constant 0 : i32
    %c0_i32_1 = arith.constant 0 : i32
    return %arg1, %c0_i32, %c0_i32_0 : i32, i32, i32
  }
  func.func @transform_2(%arg0: i32, %arg1: i32) -> (i32, i32, i32) {
    %c0_i32 = arith.constant 0 : i32
    %c0_i32_0 = arith.constant 0 : i32
    %c0_i32_1 = arith.constant 0 : i32
    return %arg1, %c0_i32, %c0_i32_0 : i32, i32, i32
  }
  func.func @transform_3(%arg0: i32, %arg1: i32) -> (i32, i32, i32, i32) {
    %c0_i32 = arith.constant 0 : i32
    %c0_i32_0 = arith.constant 0 : i32
    %c0_i32_1 = arith.constant 0 : i32
    %c0_i32_2 = arith.constant 0 : i32
    return %arg1, %c0_i32, %c0_i32_0, %c0_i32_1 : i32, i32, i32, i32
  }
  func.func @transform_4(%arg0: i32, %arg1: i32) -> (i32, i32, i32, i32) {
    %c0_i32 = arith.constant 0 : i32
    %c0_i32_0 = arith.constant 0 : i32
    %c0_i32_1 = arith.constant 0 : i32
    %c0_i32_2 = arith.constant 0 : i32
    return %arg1, %c0_i32, %c0_i32_0, %c0_i32_1 : i32, i32, i32, i32
  }
  func.func @transform_5(%arg0: i32, %arg1: i32) -> (i32, i32, i32) {
    %c0_i32 = arith.constant 0 : i32
    %c0_i32_0 = arith.constant 0 : i32
    %c0_i32_1 = arith.constant 0 : i32
    return %arg1, %c0_i32, %c0_i32_0 : i32, i32, i32
  }
  func.func @transform_6(%arg0: i32, %arg1: i32) -> (i32, i32, i32) {
    %c0_i32 = arith.constant 0 : i32
    %c0_i32_0 = arith.constant 0 : i32
    %c0_i32_1 = arith.constant 0 : i32
    return %arg1, %c0_i32, %c0_i32_0 : i32, i32, i32
  }
  func.func @transform_7(%arg0: i32, %arg1: i32) -> (i32, i32, i32) {
    %c0_i32 = arith.constant 0 : i32
    %c0_i32_0 = arith.constant 0 : i32
    %c0_i32_1 = arith.constant 0 : i32
    return %arg1, %c0_i32, %c0_i32_0 : i32, i32, i32
  }
  func.func @transform_8(%arg0: i32, %arg1: i32) -> (i32, i32, i32) {
    %c0_i32 = arith.constant 0 : i32
    %c0_i32_0 = arith.constant 0 : i32
    %c0_i32_1 = arith.constant 0 : i32
    return %arg1, %c0_i32, %c0_i32_0 : i32, i32, i32
  }
  func.func @transform_9(%arg0: i32, %arg1: i32) -> (i32, i32, i32) {
    %c0_i32 = arith.constant 0 : i32
    %c0_i32_0 = arith.constant 0 : i32
    %c0_i32_1 = arith.constant 0 : i32
    return %arg1, %c0_i32, %c0_i32_0 : i32, i32, i32
  }
  func.func @transform_10(%arg0: i32, %arg1: i32) -> (i32, i32, i32) {
    %c0_i32 = arith.constant 0 : i32
    %c0_i32_0 = arith.constant 0 : i32
    %c0_i32_1 = arith.constant 0 : i32
    return %arg1, %c0_i32, %c0_i32_0 : i32, i32, i32
  }
  func.func @transform_11(%arg0: i32, %arg1: i32) -> (i32, i32, i32) {
    %c0_i32 = arith.constant 0 : i32
    %c0_i32_0 = arith.constant 0 : i32
    %c0_i32_1 = arith.constant 0 : i32
    return %arg1, %c0_i32, %c0_i32_0 : i32, i32, i32
  }
  func.func @transform_12(%arg0: i32, %arg1: i32) -> (i32, i32, i32) {
    %c0_i32 = arith.constant 0 : i32
    %c0_i32_0 = arith.constant 0 : i32
    %c0_i32_1 = arith.constant 0 : i32
    return %arg0, %c0_i32, %c0_i32_0 : i32, i32, i32
  }
}

</mosaic_0001>

<llo_original>
// kernel: tpu_custom_call.1
$region0: #{tpu_custom_call.1}
  #allocation0 [shape = 'u32[]', space=smem, size = 0x4, offset = 0x4, fixed_abs, tag = 'smem constant byte address 0x4 - core index']
  #allocation1 [shape = 'u32[72,128]{1,0:T(1,128)}', space=vmem, size = 0x9000, scoped, tag = 'internal scratch']
  %s0 = inlined_call_operand.vmem [shape: f32[2,8,32], index: 0, kind: input, shape index: {}]
  %s1 = inlined_call_operand.vmem [shape: f32[2,1,32], index: 1, kind: input, shape index: {}]
  %s2 = inlined_call_operand.vmem [shape: f32[2,1,32], index: 2, kind: input, shape index: {}]
  %s3 = inlined_call_operand.vmem [shape: bf16[2,4,32,8], index: 3, kind: input, shape index: {}]
  %s4 = inlined_call_operand.vmem [shape: bf16[2,4,8,32], index: 4, kind: input, shape index: {}]
  %s5 = inlined_call_operand.vmem [shape: f32[2,1,32], index: 5, kind: input, shape index: {}]
  %s6 = inlined_call_operand.vmem [shape: f32[2,1,32], index: 6, kind: input, shape index: {}]
  %s7 = inlined_call_operand.vmem [shape: f32[2,1,32], index: 7, kind: input, shape index: {}]
  %s8 = inlined_call_operand.vmem [shape: bf16[2,32,128], index: 8, kind: input, shape index: {}]
  %s9 = inlined_call_operand.vmem [shape: f32[2,1,128], index: 9, kind: input, shape index: {}]
  %s10 = inlined_call_operand.vmem [shape: bf16[2,128,32], index: 10, kind: input, shape index: {}]
  %s11 = inlined_call_operand.vmem [shape: f32[2,1,32], index: 11, kind: input, shape index: {}]
  %s12 = inlined_call_operand.hbm [shape: f32[2,8,32], index: 12, kind: output, shape index: {}]
  %s13 = sld [smem:[#allocation0]]
  $region85: #{tpu_custom_call.1} parent=0
    _
  %s15 = ssub.s32 1, %s13
  %s16 = scalar_select 0, %s15, %s13
  $region1: #{tpu_custom_call.1} parent=0
    #allocation2 [shape = 'u8[8192]{0}', space=vmem, size = 0x2000, scoped, tag = 'output window, operand 0']
    #allocation3 [shape = 's32[2]{0}', space=sflag, size = 0x8, scoped, tag = 'scoped memory for tpu_custom_call.1']
    %17 = vsyncpa [#allocation3], 0
    %s18 = scalar_lea.sflag [#allocation3], 1
    %19 = vsyncpa %s18, 0
    loop: start=0, step=1, limit=6
    $region2: #{tpu_custom_call.1} parent=1 // loop_pre_header
      _
    $region3: #{tpu_custom_call.1} parent=1 // loop_header
      %s21 = sphi 0, %s25
      %p22 = scmp.ge.s32.totalorder %s21, 6
      %s28 = sphi 0, %s40
      %s29 = sphi 0, %s36
      %s30 = sphi 0, %s28
      %s31 = sphi 0, %s29
      %s32 = sphi 0, %s30
      %s33 = sphi 0, %s31
      %s43 = sphi 0, %s45
      %s46 = sphi 0, %s43
      %s47 = sphi 0, %s46
      %s63 = sphi 0, %s47
      %s69 = sphi 0, %s71
      %s72 = sphi 0, %s69
      %s73 = sphi 0, %s72
      %s89 = sphi 0, %s73
      %s95 = sphi 0, %s97
      %s98 = sphi 0, %s95
      %s99 = sphi 0, %s98
      %s115 = sphi 0, %s99
      %s121 = sphi 0, %s123
      %s124 = sphi 0, %s121
      %s125 = sphi 0, %s124
      %s141 = sphi 0, %s125
      %s147 = sphi 0, %s149
      %s150 = sphi 0, %s147
      %s151 = sphi 0, %s150
      %s167 = sphi 0, %s151
      %s173 = sphi 0, %s175
      %s176 = sphi 0, %s173
      %s177 = sphi 0, %s176
      %s193 = sphi 0, %s177
      %s199 = sphi 0, %s201
      %s202 = sphi 0, %s199
      %s203 = sphi 0, %s202
      %s219 = sphi 0, %s203
      %s225 = sphi 0, %s227
      %s228 = sphi 0, %s225
      %s229 = sphi 0, %s228
      %s245 = sphi 0, %s229
      %s251 = sphi 0, %s253
      %s254 = sphi 0, %s251
      %s255 = sphi 0, %s254
      %s271 = sphi 0, %s255
      %s277 = sphi 0, %s279
      %s280 = sphi 0, %s277
      %s281 = sphi 0, %s280
      %s297 = sphi 0, %s281
      %s303 = sphi 0, %s305
      %s306 = sphi 0, %s303
      %s307 = sphi 0, %s306
      %s323 = sphi 0, %s307
      %s329 = sphi 0, %s331
      %s332 = sphi 0, %s329
      %s333 = sphi 0, %s332
      %s349 = sphi 0, %s333
      %s355 = sphi 0, %s357
      %s358 = sphi 0, %s355
      %s359 = sphi 0, %s358
      %s375 = sphi 0, %s359
    $region4: #{tpu_custom_call.1} parent=1 // loop_header_branch
      %24 = sbr.rel (%p22) target = $region8
    $region5: #{tpu_custom_call.1} parent=1 // loop_body
      %s26 = ssub.s32 %s21, 1
      %s27 = ssub.s32 %s21, 2
      %s34 = sadd.s32 1, %s29
      %p35 = scmp.ge.s32.totalorder %s34, 2
      %s36 = scalar_select %p35, 0, %s34
      %s37 = sadd.s32 1, %s28
      %s38 = scalar_select %p35, %s37, %s28
      %p39 = scmp.ge.s32.totalorder %s38, 2
      %s40 = scalar_select %p39, 0, %s38
      %s41 = ssub.s32 %s28, %s40
      %p42 = scmp.eq.s32.totalorder %s41, 0
      %s44 = sadd.s32 %s43, 1
      %s45 = scalar_select %p42, %s43, %s44
      %p48 = pneg %p42
      %p49 = scmp.eq.s32.totalorder %s21, 3
      %p50 = por %p48, %p49
      %p51 = scmp.ne.s32.totalorder %s43, %s46
      %p52 = scmp.eq.s32.totalorder %s21, 0
      %p53 = por %p51, %p52
      %p54 = scmp.ne.s32.totalorder %s43, %s46
      %p55 = scmp.eq.s32.totalorder %s26, 3
      %p56 = por %p54, %p55
      %p57 = scmp.ne.s32.totalorder %s46, %s47
      %p58 = scmp.eq.s32.totalorder %s26, 0
      %p59 = por %p57, %p58
      %p60 = scmp.ne.s32.totalorder %s46, %s47
      %p61 = scmp.eq.s32.totalorder %s27, 3
      %p62 = por %p60, %p61
      %p64 = scmp.ne.s32.totalorder %s47, %s63
      %p65 = scmp.eq.s32.totalorder %s27, 0
      %p66 = por %p64, %p65
      %s67 = ssub.s32 %s29, %s36
      %p68 = scmp.eq.s32.totalorder %s67, 0
      %s70 = sadd.s32 %s69, 1
      %s71 = scalar_select %p68, %s69, %s70
      %p74 = pneg %p68
      %p75 = scmp.eq.s32.totalorder %s21, 3
      %p76 = por %p74, %p75
      %p77 = scmp.ne.s32.totalorder %s69, %s72
      %p78 = scmp.eq.s32.totalorder %s21, 0
      %p79 = por %p77, %p78
      %p80 = scmp.ne.s32.totalorder %s69, %s72
      %p81 = scmp.eq.s32.totalorder %s26, 3
      %p82 = por %p80, %p81
      %p83 = scmp.ne.s32.totalorder %s72, %s73
      %p84 = scmp.eq.s32.totalorder %s26, 0
      %p85 = por %p83, %p84
      %p86 = scmp.ne.s32.totalorder %s72, %s73
      %p87 = scmp.eq.s32.totalorder %s27, 3
      %p88 = por %p86, %p87
      %p90 = scmp.ne.s32.totalorder %s73, %s89
      %p91 = scmp.eq.s32.totalorder %s27, 0
      %p92 = por %p90, %p91
      %s93 = ssub.s32 %s29, %s36
      %p94 = scmp.eq.s32.totalorder %s93, 0
      %s96 = sadd.s32 %s95, 1
      %s97 = scalar_select %p94, %s95, %s96
      %p100 = pneg %p94
      %p101 = scmp.eq.s32.totalorder %s21, 3
      %p102 = por %p100, %p101
      %p103 = scmp.ne.s32.totalorder %s95, %s98
      %p104 = scmp.eq.s32.totalorder %s21, 0
      %p105 = por %p103, %p104
      %p106 = scmp.ne.s32.totalorder %s95, %s98
      %p107 = scmp.eq.s32.totalorder %s26, 3
      %p108 = por %p106, %p107
      %p109 = scmp.ne.s32.totalorder %s98, %s99
      %p110 = scmp.eq.s32.totalorder %s26, 0
      %p111 = por %p109, %p110
      %p112 = scmp.ne.s32.totalorder %s98, %s99
      %p113 = scmp.eq.s32.totalorder %s27, 3
      %p114 = por %p112, %p113
      %p116 = scmp.ne.s32.totalorder %s99, %s115
      %p117 = scmp.eq.s32.totalorder %s27, 0
      %p118 = por %p116, %p117
      %s119 = ssub.s32 %s29, %s36
      %p120 = scmp.eq.s32.totalorder %s119, 0
      %s122 = sadd.s32 %s121, 1
      %s123 = scalar_select %p120, %s121, %s122
      %p126 = pneg %p120
      %p127 = scmp.eq.s32.totalorder %s21, 3
      %p128 = por %p126, %p127
      %p129 = scmp.ne.s32.totalorder %s121, %s124
      %p130 = scmp.eq.s32.totalorder %s21, 0
      %p131 = por %p129, %p130
      %p132 = scmp.ne.s32.totalorder %s121, %s124
      %p133 = scmp.eq.s32.totalorder %s26, 3
      %p134 = por %p132, %p133
      %p135 = scmp.ne.s32.totalorder %s124, %s125
      %p136 = scmp.eq.s32.totalorder %s26, 0
      %p137 = por %p135, %p136
      %p138 = scmp.ne.s32.totalorder %s124, %s125
      %p139 = scmp.eq.s32.totalorder %s27, 3
      %p140 = por %p138, %p139
      %p142 = scmp.ne.s32.totalorder %s125, %s141
      %p143 = scmp.eq.s32.totalorder %s27, 0
      %p144 = por %p142, %p143
      %s145 = ssub.s32 %s29, %s36
      %p146 = scmp.eq.s32.totalorder %s145, 0
      %s148 = sadd.s32 %s147, 1
      %s149 = scalar_select %p146, %s147, %s148
      %p152 = pneg %p146
      %p153 = scmp.eq.s32.totalorder %s21, 3
      %p154 = por %p152, %p153
      %p155 = scmp.ne.s32.totalorder %s147, %s150
      %p156 = scmp.eq.s32.totalorder %s21, 0
      %p157 = por %p155, %p156
      %p158 = scmp.ne.s32.totalorder %s147, %s150
      %p159 = scmp.eq.s32.totalorder %s26, 3
      %p160 = por %p158, %p159
      %p161 = scmp.ne.s32.totalorder %s150, %s151
      %p162 = scmp.eq.s32.totalorder %s26, 0
      %p163 = por %p161, %p162
      %p164 = scmp.ne.s32.totalorder %s150, %s151
      %p165 = scmp.eq.s32.totalorder %s27, 3
      %p166 = por %p164, %p165
      %p168 = scmp.ne.s32.totalorder %s151, %s167
      %p169 = scmp.eq.s32.totalorder %s27, 0
      %p170 = por %p168, %p169
      %s171 = ssub.s32 %s29, %s36
      %p172 = scmp.eq.s32.totalorder %s171, 0
      %s174 = sadd.s32 %s173, 1
      %s175 = scalar_select %p172, %s173, %s174
      %p178 = pneg %p172
      %p179 = scmp.eq.s32.totalorder %s21, 3
      %p180 = por %p178, %p179
      %p181 = scmp.ne.s32.totalorder %s173, %s176
      %p182 = scmp.eq.s32.totalorder %s21, 0
      %p183 = por %p181, %p182
      %p184 = scmp.ne.s32.totalorder %s173, %s176
      %p185 = scmp.eq.s32.totalorder %s26, 3
      %p186 = por %p184, %p185
      %p187 = scmp.ne.s32.totalorder %s176, %s177
      %p188 = scmp.eq.s32.totalorder %s26, 0
      %p189 = por %p187, %p188
      %p190 = scmp.ne.s32.totalorder %s176, %s177
      %p191 = scmp.eq.s32.totalorder %s27, 3
      %p192 = por %p190, %p191
      %p194 = scmp.ne.s32.totalorder %s177, %s193
      %p195 = scmp.eq.s32.totalorder %s27, 0
      %p196 = por %p194, %p195
      %s197 = ssub.s32 %s29, %s36
      %p198 = scmp.eq.s32.totalorder %s197, 0
      %s200 = sadd.s32 %s199, 1
      %s201 = scalar_select %p198, %s199, %s200
      %p204 = pneg %p198
      %p205 = scmp.eq.s32.totalorder %s21, 3
      %p206 = por %p204, %p205
      %p207 = scmp.ne.s32.totalorder %s199, %s202
      %p208 = scmp.eq.s32.totalorder %s21, 0
      %p209 = por %p207, %p208
      %p210 = scmp.ne.s32.totalorder %s199, %s202
      %p211 = scmp.eq.s32.totalorder %s26, 3
      %p212 = por %p210, %p211
      %p213 = scmp.ne.s32.totalorder %s202, %s203
      %p214 = scmp.eq.s32.totalorder %s26, 0
      %p215 = por %p213, %p214
      %p216 = scmp.ne.s32.totalorder %s202, %s203
      %p217 = scmp.eq.s32.totalorder %s27, 3
      %p218 = por %p216, %p217
      %p220 = scmp.ne.s32.totalorder %s203, %s219
      %p221 = scmp.eq.s32.totalorder %s27, 0
      %p222 = por %p220, %p221
      %s223 = ssub.s32 %s29, %s36
      %p224 = scmp.eq.s32.totalorder %s223, 0
      %s226 = sadd.s32 %s225, 1
      %s227 = scalar_select %p224, %s225, %s226
      %p230 = pneg %p224
      %p231 = scmp.eq.s32.totalorder %s21, 3
      %p232 = por %p230, %p231
      %p233 = scmp.ne.s32.totalorder %s225, %s228
      %p234 = scmp.eq.s32.totalorder %s21, 0
      %p235 = por %p233, %p234
      %p236 = scmp.ne.s32.totalorder %s225, %s228
      %p237 = scmp.eq.s32.totalorder %s26, 3
      %p238 = por %p236, %p237
      %p239 = scmp.ne.s32.totalorder %s228, %s229
      %p240 = scmp.eq.s32.totalorder %s26, 0
      %p241 = por %p239, %p240
      %p242 = scmp.ne.s32.totalorder %s228, %s229
      %p243 = scmp.eq.s32.totalorder %s27, 3
      %p244 = por %p242, %p243
      %p246 = scmp.ne.s32.totalorder %s229, %s245
      %p247 = scmp.eq.s32.totalorder %s27, 0
      %p248 = por %p246, %p247
      %s249 = ssub.s32 %s29, %s36
      %p250 = scmp.eq.s32.totalorder %s249, 0
      %s252 = sadd.s32 %s251, 1
      %s253 = scalar_select %p250, %s251, %s252
      %p256 = pneg %p250
      %p257 = scmp.eq.s32.totalorder %s21, 3
      %p258 = por %p256, %p257
      %p259 = scmp.ne.s32.totalorder %s251, %s254
      %p260 = scmp.eq.s32.totalorder %s21, 0
      %p261 = por %p259, %p260
      %p262 = scmp.ne.s32.totalorder %s251, %s254
      %p263 = scmp.eq.s32.totalorder %s26, 3
      %p264 = por %p262, %p263
      %p265 = scmp.ne.s32.totalorder %s254, %s255
      %p266 = scmp.eq.s32.totalorder %s26, 0
      %p267 = por %p265, %p266
      %p268 = scmp.ne.s32.totalorder %s254, %s255
      %p269 = scmp.eq.s32.totalorder %s27, 3
      %p270 = por %p268, %p269
      %p272 = scmp.ne.s32.totalorder %s255, %s271
      %p273 = scmp.eq.s32.totalorder %s27, 0
      %p274 = por %p272, %p273
      %s275 = ssub.s32 %s29, %s36
      %p276 = scmp.eq.s32.totalorder %s275, 0
      %s278 = sadd.s32 %s277, 1
      %s279 = scalar_select %p276, %s277, %s278
      %p282 = pneg %p276
      %p283 = scmp.eq.s32.totalorder %s21, 3
      %p284 = por %p282, %p283
      %p285 = scmp.ne.s32.totalorder %s277, %s280
      %p286 = scmp.eq.s32.totalorder %s21, 0
      %p287 = por %p285, %p286
      %p288 = scmp.ne.s32.totalorder %s277, %s280
      %p289 = scmp.eq.s32.totalorder %s26, 3
      %p290 = por %p288, %p289
      %p291 = scmp.ne.s32.totalorder %s280, %s281
      %p292 = scmp.eq.s32.totalorder %s26, 0
      %p293 = por %p291, %p292
      %p294 = scmp.ne.s32.totalorder %s280, %s281
      %p295 = scmp.eq.s32.totalorder %s27, 3
      %p296 = por %p294, %p295
      %p298 = scmp.ne.s32.totalorder %s281, %s297
      %p299 = scmp.eq.s32.totalorder %s27, 0
      %p300 = por %p298, %p299
      %s301 = ssub.s32 %s29, %s36
      %p302 = scmp.eq.s32.totalorder %s301, 0
      %s304 = sadd.s32 %s303, 1
      %s305 = scalar_select %p302, %s303, %s304
      %p308 = pneg %p302
      %p309 = scmp.eq.s32.totalorder %s21, 3
      %p310 = por %p308, %p309
      %p311 = scmp.ne.s32.totalorder %s303, %s306
      %p312 = scmp.eq.s32.totalorder %s21, 0
      %p313 = por %p311, %p312
      %p314 = scmp.ne.s32.totalorder %s303, %s306
      %p315 = scmp.eq.s32.totalorder %s26, 3
      %p316 = por %p314, %p315
      %p317 = scmp.ne.s32.totalorder %s306, %s307
      %p318 = scmp.eq.s32.totalorder %s26, 0
      %p319 = por %p317, %p318
      %p320 = scmp.ne.s32.totalorder %s306, %s307
      %p321 = scmp.eq.s32.totalorder %s27, 3
      %p322 = por %p320, %p321
      %p324 = scmp.ne.s32.totalorder %s307, %s323
      %p325 = scmp.eq.s32.totalorder %s27, 0
      %p326 = por %p324, %p325
      %s327 = ssub.s32 %s29, %s36
      %p328 = scmp.eq.s32.totalorder %s327, 0
      %s330 = sadd.s32 %s329, 1
      %s331 = scalar_select %p328, %s329, %s330
      %p334 = pneg %p328
      %p335 = scmp.eq.s32.totalorder %s21, 3
      %p336 = por %p334, %p335
      %p337 = scmp.ne.s32.totalorder %s329, %s332
      %p338 = scmp.eq.s32.totalorder %s21, 0
      %p339 = por %p337, %p338
      %p340 = scmp.ne.s32.totalorder %s329, %s332
      %p341 = scmp.eq.s32.totalorder %s26, 3
      %p342 = por %p340, %p341
      %p343 = scmp.ne.s32.totalorder %s332, %s333
      %p344 = scmp.eq.s32.totalorder %s26, 0
      %p345 = por %p343, %p344
      %p346 = scmp.ne.s32.totalorder %s332, %s333
      %p347 = scmp.eq.s32.totalorder %s27, 3
      %p348 = por %p346, %p347
      %p350 = scmp.ne.s32.totalorder %s333, %s349
      %p351 = scmp.eq.s32.totalorder %s27, 0
      %p352 = por %p350, %p351
      %s353 = ssub.s32 %s28, %s40
      %p354 = scmp.eq.s32.totalorder %s353, 0
      %s356 = sadd.s32 %s355, 1
      %s357 = scalar_select %p354, %s355, %s356
      %p360 = pneg %p354
      %p361 = scmp.eq.s32.totalorder %s21, 3
      %p362 = por %p360, %p361
      %p363 = scmp.ne.s32.totalorder %s355, %s358
      %p364 = scmp.eq.s32.totalorder %s21, 0
      %p365 = por %p363, %p364
      %p366 = scmp.ne.s32.totalorder %s355, %s358
      %p367 = scmp.eq.s32.totalorder %s26, 3
      %p368 = por %p366, %p367
      %p369 = scmp.ne.s32.totalorder %s358, %s359
      %p370 = scmp.eq.s32.totalorder %s26, 0
      %p371 = por %p369, %p370
      %p372 = scmp.ne.s32.totalorder %s358, %s359
      %p373 = scmp.eq.s32.totalorder %s27, 3
      %p374 = por %p372, %p373
      %p376 = scmp.ne.s32.totalorder %s359, %s375
      %p377 = scmp.eq.s32.totalorder %s27, 0
      %p378 = por %p376, %p377
      %p379 = scmp.le.s32.totalorder 1, %s21
      %p380 = scmp.lt.s32.totalorder %s21, 5
      %p381 = pnand %p379, %p380
      %p382 = pneg %p381
      // Predicated region
      $region9: #{tpu_custom_call.1} parent=5 // pred_check
        _
      $region10: #{tpu_custom_call.1} parent=5 // pred_check_branch
        %384 = sbr.rel (%p381) target = $region12
      $region11: #{tpu_custom_call.1} parent=5 // pred_region
        %s385 = ssub.s32 %s21, 1
      $region12: #{tpu_custom_call.1} parent=5 // pred_fallthru
        _
      %p386 = scmp.lt.s32.totalorder %s21, 4
      // Predicated region
      $region13: #{tpu_custom_call.1} parent=5 // pred_check
        %p387 = pneg %p386
      $region14: #{tpu_custom_call.1} parent=5 // pred_check_branch
        %389 = sbr.rel (%p387) target = $region16
      $region15: #{tpu_custom_call.1} parent=5 // pred_region
        // Predicated region
        $region17: #{tpu_custom_call.1} parent=15 // pred_check
          %p390 = pneg %p53
        $region18: #{tpu_custom_call.1} parent=15 // pred_check_branch
          %392 = sbr.rel (%p390) target = $region20
        $region19: #{tpu_custom_call.1} parent=15 // pred_region
          %p393 = scmp.lt.s32.totalorder %s28, 1
          %s394 = scalar_select %p393, %s28, 1
          %s395 = smul.addr %s394, 8
          %s396 = scalar_lea.vmem %s0, %s395
        $region20: #{tpu_custom_call.1} parent=15 // pred_fallthru
          _
        // Predicated region
        $region21: #{tpu_custom_call.1} parent=15 // pred_check
          %p397 = pneg %p79
        $region22: #{tpu_custom_call.1} parent=15 // pred_check_branch
          %399 = sbr.rel (%p397) target = $region24
        $region23: #{tpu_custom_call.1} parent=15 // pred_region
          %p400 = scmp.lt.s32.totalorder %s29, 1
          %s401 = scalar_select %p400, %s29, 1
          %s402 = scalar_lea.vmem %s1, %s401
        $region24: #{tpu_custom_call.1} parent=15 // pred_fallthru
          _
        // Predicated region
        $region25: #{tpu_custom_call.1} parent=15 // pred_check
          %p403 = pneg %p105
        $region26: #{tpu_custom_call.1} parent=15 // pred_check_branch
          %405 = sbr.rel (%p403) target = $region28
        $region27: #{tpu_custom_call.1} parent=15 // pred_region
          %p406 = scmp.lt.s32.totalorder %s29, 1
          %s407 = scalar_select %p406, %s29, 1
          %s408 = scalar_lea.vmem %s2, %s407
        $region28: #{tpu_custom_call.1} parent=15 // pred_fallthru
          _
        // Predicated region
        $region29: #{tpu_custom_call.1} parent=15 // pred_check
          %p409 = pneg %p131
        $region30: #{tpu_custom_call.1} parent=15 // pred_check_branch
          %411 = sbr.rel (%p409) target = $region32
        $region31: #{tpu_custom_call.1} parent=15 // pred_region
          %p412 = scmp.lt.s32.totalorder %s29, 1
          %s413 = scalar_select %p412, %s29, 1
          %s414 = smul.addr %s413, 16
          %s415 = smul.addr %s414, 4
          %s416 = scalar_lea.vmem %s3, %s415
        $region32: #{tpu_custom_call.1} parent=15 // pred_fallthru
          _
        // Predicated region
        $region33: #{tpu_custom_call.1} parent=15 // pred_check
          %p417 = pneg %p157
        $region34: #{tpu_custom_call.1} parent=15 // pred_check_branch
          %419 = sbr.rel (%p417) target = $region36
        $region35: #{tpu_custom_call.1} parent=15 // pred_region
          %p420 = scmp.lt.s32.totalorder %s29, 1
          %s421 = scalar_select %p420, %s29, 1
          %s422 = smul.addr %s421, 4
          %s423 = smul.addr %s422, 4
          %s424 = scalar_lea.vmem %s4, %s423
        $region36: #{tpu_custom_call.1} parent=15 // pred_fallthru
          _
        // Predicated region
        $region37: #{tpu_custom_call.1} parent=15 // pred_check
          %p425 = pneg %p183
        $region38: #{tpu_custom_call.1} parent=15 // pred_check_branch
          %427 = sbr.rel (%p425) target = $region40
        $region39: #{tpu_custom_call.1} parent=15 // pred_region
          %p428 = scmp.lt.s32.totalorder %s29, 1
          %s429 = scalar_select %p428, %s29, 1
          %s430 = scalar_lea.vmem %s5, %s429
        $region40: #{tpu_custom_call.1} parent=15 // pred_fallthru
          _
        // Predicated region
        $region41: #{tpu_custom_call.1} parent=15 // pred_check
          %p431 = pneg %p209
        $region42: #{tpu_custom_call.1} parent=15 // pred_check_branch
          %433 = sbr.rel (%p431) target = $region44
        $region43: #{tpu_custom_call.1} parent=15 // pred_region
          %p434 = scmp.lt.s32.totalorder %s29, 1
          %s435 = scalar_select %p434, %s29, 1
          %s436 = scalar_lea.vmem %s6, %s435
        $region44: #{tpu_custom_call.1} parent=15 // pred_fallthru
          _
        // Predicated region
        $region45: #{tpu_custom_call.1} parent=15 // pred_check
          %p437 = pneg %p235
        $region46: #{tpu_custom_call.1} parent=15 // pred_check_branch
          %439 = sbr.rel (%p437) target = $region48
        $region47: #{tpu_custom_call.1} parent=15 // pred_region
          %p440 = scmp.lt.s32.totalorder %s29, 1
          %s441 = scalar_select %p440, %s29, 1
          %s442 = scalar_lea.vmem %s7, %s441
        $region48: #{tpu_custom_call.1} parent=15 // pred_fallthru
          _
        // Predicated region
        $region49: #{tpu_custom_call.1} parent=15 // pred_check
          %p443 = pneg %p261
        $region50: #{tpu_custom_call.1} parent=15 // pred_check_branch
          %445 = sbr.rel (%p443) target = $region52
        $region51: #{tpu_custom_call.1} parent=15 // pred_region
          %p446 = scmp.lt.s32.totalorder %s29, 1
          %s447 = scalar_select %p446, %s29, 1
          %s448 = smul.addr %s447, 4
          %s449 = smul.addr %s448, 4
          %s450 = scalar_lea.vmem %s8, %s449
        $region52: #{tpu_custom_call.1} parent=15 // pred_fallthru
          _
        // Predicated region
        $region53: #{tpu_custom_call.1} parent=15 // pred_check
          %p451 = pneg %p287
        $region54: #{tpu_custom_call.1} parent=15 // pred_check_branch
          %453 = sbr.rel (%p451) target = $region56
        $region55: #{tpu_custom_call.1} parent=15 // pred_region
          %p454 = scmp.lt.s32.totalorder %s29, 1
          %s455 = scalar_select %p454, %s29, 1
          %s456 = scalar_lea.vmem %s9, %s455
        $region56: #{tpu_custom_call.1} parent=15 // pred_fallthru
          _
        // Predicated region
        $region57: #{tpu_custom_call.1} parent=15 // pred_check
          %p457 = pneg %p313
        $region58: #{tpu_custom_call.1} parent=15 // pred_check_branch
          %459 = sbr.rel (%p457) target = $region60
        $region59: #{tpu_custom_call.1} parent=15 // pred_region
          %p460 = scmp.lt.s32.totalorder %s29, 1
          %s461 = scalar_select %p460, %s29, 1
          %s462 = smul.addr %s461, 16
          %s463 = smul.addr %s462, 4
          %s464 = scalar_lea.vmem %s10, %s463
        $region60: #{tpu_custom_call.1} parent=15 // pred_fallthru
          _
        // Predicated region
        $region61: #{tpu_custom_call.1} parent=15 // pred_check
          %p465 = pneg %p339
        $region62: #{tpu_custom_call.1} parent=15 // pred_check_branch
          %467 = sbr.rel (%p465) target = $region64
        $region63: #{tpu_custom_call.1} parent=15 // pred_region
          %p468 = scmp.lt.s32.totalorder %s29, 1
          %s469 = scalar_select %p468, %s29, 1
          %s470 = scalar_lea.vmem %s11, %s469
        $region64: #{tpu_custom_call.1} parent=15 // pred_fallthru
          _
      $region16: #{tpu_custom_call.1} parent=5 // pred_fallthru
        _
      %p471 = scmp.le.s32.totalorder 1, %s21
      %p472 = scmp.lt.s32.totalorder %s21, 5
      %p473 = pnand %p471, %p472
      %p474 = pneg %p473
      // Predicated region
      $region65: #{tpu_custom_call.1} parent=5 // pred_check
        _
      $region66: #{tpu_custom_call.1} parent=5 // pred_check_branch
        %476 = sbr.rel (%p473) target = $region68
      $region67: #{tpu_custom_call.1} parent=5 // pred_region
        %s477 = ssub.s32 %s21, 1
        %p478 = scmp.lt.s32.totalorder %s30, 1
        %s479 = scalar_select %p478, %s30, 1
        %s480 = smul.addr %s479, 8
        %s481 = scalar_lea.vmem %s0, %s480
        %p482 = pneg %p59
        %p483 = pneg %p56
        %p484 = scmp.lt.s32.totalorder %s31, 1
        %s485 = scalar_select %p484, %s31, 1
        %s486 = scalar_lea.vmem %s1, %s485
        %p487 = pneg %p85
        %p488 = pneg %p82
        %p489 = scmp.lt.s32.totalorder %s31, 1
        %s490 = scalar_select %p489, %s31, 1
        %s491 = scalar_lea.vmem %s2, %s490
        %p492 = pneg %p111
        %p493 = pneg %p108
        %p494 = scmp.lt.s32.totalorder %s31, 1
        %s495 = scalar_select %p494, %s31, 1
        %s496 = smul.addr %s495, 16
        %s497 = smul.addr %s496, 4
        %s498 = scalar_lea.vmem %s3, %s497
        %p499 = pneg %p137
        %p500 = pneg %p134
        %p501 = scmp.lt.s32.totalorder %s31, 1
        %s502 = scalar_select %p501, %s31, 1
        %s503 = smul.addr %s502, 4
        %s504 = smul.addr %s503, 4
        %s505 = scalar_lea.vmem %s4, %s504
        %p506 = pneg %p163
        %p507 = pneg %p160
        %p508 = scmp.lt.s32.totalorder %s31, 1
        %s509 = scalar_select %p508, %s31, 1
        %s510 = scalar_lea.vmem %s5, %s509
        %p511 = pneg %p189
        %p512 = pneg %p186
        %p513 = scmp.lt.s32.totalorder %s31, 1
        %s514 = scalar_select %p513, %s31, 1
        %s515 = scalar_lea.vmem %s6, %s514
        %p516 = pneg %p215
        %p517 = pneg %p212
        %p518 = scmp.lt.s32.totalorder %s31, 1
        %s519 = scalar_select %p518, %s31, 1
        %s520 = scalar_lea.vmem %s7, %s519
        %p521 = pneg %p241
        %p522 = pneg %p238
        %p523 = scmp.lt.s32.totalorder %s31, 1
        %s524 = scalar_select %p523, %s31, 1
        %s525 = smul.addr %s524, 4
        %s526 = smul.addr %s525, 4
        %s527 = scalar_lea.vmem %s8, %s526
        %p528 = pneg %p267
        %p529 = pneg %p264
        %p530 = scmp.lt.s32.totalorder %s31, 1
        %s531 = scalar_select %p530, %s31, 1
        %s532 = scalar_lea.vmem %s9, %s531
        %p533 = pneg %p293
        %p534 = pneg %p290
        %p535 = scmp.lt.s32.totalorder %s31, 1
        %s536 = scalar_select %p535, %s31, 1
        %s537 = smul.addr %s536, 16
        %s538 = smul.addr %s537, 4
        %s539 = scalar_lea.vmem %s10, %s538
        %p540 = pneg %p319
        %p541 = pneg %p316
        %p542 = scmp.lt.s32.totalorder %s31, 1
        %s543 = scalar_select %p542, %s31, 1
        %s544 = scalar_lea.vmem %s11, %s543
        %p545 = pneg %p345
        %p546 = pneg %p342
        %p547 = pneg %p371
        %p548 = pneg %p368
        %s549 = sand.u32 %s358, 1
        %s550 = scalar_lea.sflag [#allocation3], %s549
        %s551 = sand.u32 %s358, 1
        %s552 = smul.addr %s551, 8
        %s553 = scalar_lea.vmem [#allocation2], %s552
        %p554 = scmp.lt.s32.totalorder %s30, 1
        %s555 = scalar_select %p554, %s30, 1
        %s556 = smul.addr %s555, 8
        %s557 = scalar_lea.vmem %s0, %s556
        %p558 = scmp.lt.s32.totalorder %s31, 1
        %s559 = scalar_select %p558, %s31, 1
        %s560 = scalar_lea.vmem %s1, %s559
        %p561 = scmp.lt.s32.totalorder %s31, 1
        %s562 = scalar_select %p561, %s31, 1
        %s563 = scalar_lea.vmem %s2, %s562
        %p564 = scmp.lt.s32.totalorder %s31, 1
        %s565 = scalar_select %p564, %s31, 1
        %s566 = smul.addr %s565, 16
        %s567 = smul.addr %s566, 4
        %s568 = scalar_lea.vmem %s3, %s567
        %p569 = scmp.lt.s32.totalorder %s31, 1
        %s570 = scalar_select %p569, %s31, 1
        %s571 = smul.addr %s570, 4
        %s572 = smul.addr %s571, 4
        %s573 = scalar_lea.vmem %s4, %s572
        %p574 = scmp.lt.s32.totalorder %s31, 1
        %s575 = scalar_select %p574, %s31, 1
        %s576 = scalar_lea.vmem %s5, %s575
        %p577 = scmp.lt.s32.totalorder %s31, 1
        %s578 = scalar_select %p577, %s31, 1
        %s579 = scalar_lea.vmem %s6, %s578
        %p580 = scmp.lt.s32.totalorder %s31, 1
        %s581 = scalar_select %p580, %s31, 1
        %s582 = scalar_lea.vmem %s7, %s581
        %p583 = scmp.lt.s32.totalorder %s31, 1
        %s584 = scalar_select %p583, %s31, 1
        %s585 = smul.addr %s584, 4
        %s586 = smul.addr %s585, 4
        %s587 = scalar_lea.vmem %s8, %s586
        %p588 = scmp.lt.s32.totalorder %s31, 1
        %s589 = scalar_select %p588, %s31, 1
        %s590 = scalar_lea.vmem %s9, %s589
        %p591 = scmp.lt.s32.totalorder %s31, 1
        %s592 = scalar_select %p591, %s31, 1
        %s593 = smul.addr %s592, 16
        %s594 = smul.addr %s593, 4
        %s595 = scalar_lea.vmem %s10, %s594
        %p596 = scmp.lt.s32.totalorder %s31, 1
        %s597 = scalar_select %p596, %s31, 1
        %s598 = scalar_lea.vmem %s11, %s597
        %p600 = scmp.eq.s32.totalorder %s31, 0
        // Predicated region
        $region69: #{tpu_custom_call.1} parent=67 // pred_check
          %p601 = pneg %p600
        $region70: #{tpu_custom_call.1} parent=67 // pred_check_branch
          %603 = sbr.rel (%p601) target = $region72
        $region71: #{tpu_custom_call.1} parent=67 // pred_region
          %v604 = vld [vmem:[%s557] sm:$0xff]
          %vm605 = vcmask 261120
          %606 = vst.msk [vmem:[%s553] sm:$0xff] %vm605, %v604
        $region72: #{tpu_custom_call.1} parent=67 // pred_fallthru
          _
        %v607 = vld [vmem:[%s553] sm:$0xff]
        %v608 = vld [vmem:[%s560] sm:$0x1]
        %v609 = vld [vmem:[%s563] sm:$0x1]
        %vm610 = vcmask 261120
        %v611 = vsel %vm610, %v607, 0.0
        %612 = vadd.xlane.f32.xlu0 %v611
        %v613 = vpop.xlane.xlu0 %612
        %v614 = vrcp.pop 32.0
        %v615 = vmul.f32 32.0, %v614
        %v616 = vsub.f32 1.0, %v615
        %v617 = vmul.f32 %v614, %v616
        %v618 = vadd.f32 %v614, %v617
        %vm619 = vweird.f32 %v614
        %v620 = vsel %vm619, %v614, %v618
        %v621 = vmul.f32 %v613, %v620
        %v622 = vsub.f32 %v607, %v621
        %v623 = vmul.f32 %v622, %v622
        %v624 = vsel %vm610, %v623, 0.0
        %625 = vadd.xlane.f32.xlu0 %v624
        %v626 = vpop.xlane.xlu0 %625
        %v627 = vmul.f32 %v626, %v620
        %v628 = vadd.f32 %v627, 1e-05
        %v629 = vrsqrt.pop %v628
        %v630 = vmul.f32 %v629, %v628
        %v631 = vmul.f32 %v630, %v629
        %v632 = vmul.f32 0.5, %v631
        %v633 = vsub.f32 1.5, %v632
        %v634 = vmul.f32 %v629, %v633
        %vm635 = vweird.f32 %v628
        %vm636 = vweird.f32 %v629
        %vm637 = vmor %vm635, %vm636
        %v638 = vsel %vm637, %v629, %v634
        %v639 = vmul.f32 %v622, %v638
        %v641 = vperm.slane %v608, 0
        %v643 = vmul.f32 %v639, %v641
        %v645 = vperm.slane %v609, 0
        %v647 = vadd.f32 %v643, %v645
        %v648 = vpack.c.bf16 %v647, %v647
        %v649 = vld [vmem:[%s568] sm:$0xf]
        %v650 = vld [vmem:[%s568 + $0x4] sm:$0xf]
        %v651 = vld [vmem:[%s568 + $0x8] sm:$0xf]
        %v652 = vld [vmem:[%s568 + $0xc] sm:$0xf]
        %v653 = vld [vmem:[%s568 + $0x10] sm:$0xf]
        %v654 = vld [vmem:[%s568 + $0x14] sm:$0xf]
        %v655 = vld [vmem:[%s568 + $0x18] sm:$0xf]
        %v656 = vld [vmem:[%s568 + $0x1c] sm:$0xf]
        %v657 = vld [vmem:[%s568 + $0x20] sm:$0xf]
        %v658 = vld [vmem:[%s568 + $0x24] sm:$0xf]
        %v659 = vld [vmem:[%s568 + $0x28] sm:$0xf]
        %v660 = vld [vmem:[%s568 + $0x2c] sm:$0xf]
        %v661 = vld [vmem:[%s568 + $0x30] sm:$0xf]
        %v662 = vld [vmem:[%s568 + $0x34] sm:$0xf]
        %v663 = vld [vmem:[%s568 + $0x38] sm:$0xf]
        %v664 = vld [vmem:[%s568 + $0x3c] sm:$0xf]
        %v669 = vunpack.c.l.b16 %v649
        %v670 = vunpack.c.l.b16 %v650
        %v671 = vunpack.c.l.b16 %v651
        %v672 = vunpack.c.l.b16 %v652
        %v673 = vpack.c.b16 %v670, %v669
        %v674 = vpack.c.b16 %v672, %v671
        %v678 = vsel %vm610, %v648, 0
        %680 = vmatpush.bf16.msra.mxu0 0
        %681 = vmatpush.bf16.msra.mxu0 0
        %682 = vmatpush.bf16.msra.mxu0 0
        %683 = vmatpush.bf16.msra.mxu0 0
        %684 = vmatpush.bf16.msra.mxu0 0
        %685 = vmatpush.bf16.msra.mxu0 0
        %686 = vmatpush.bf16.msra.mxu0 %v674
        %687 = vmatpush.bf16.msra.mxu0 %v673
        %688 = vmatmul.bf16.gmra.mxu0 %v678
        %v689 = vpop.f32.mrf.mxu0
        %v690 = vadd.f32 0.0, %v689
        %v691 = vpop.f32.mrf.mxu0
        %692 = vdwg.mxu0
        %v697 = vunpack.c.l.b16 %v653
        %v698 = vunpack.c.l.b16 %v654
        %v699 = vunpack.c.l.b16 %v655
        %v700 = vunpack.c.l.b16 %v656
        %v701 = vpack.c.b16 %v698, %v697
        %v702 = vpack.c.b16 %v700, %v699
        %705 = vmatpush.bf16.msra.mxu0 0
        %706 = vmatpush.bf16.msra.mxu0 0
        %707 = vmatpush.bf16.msra.mxu0 0
        %708 = vmatpush.bf16.msra.mxu0 0
        %709 = vmatpush.bf16.msra.mxu0 0
        %710 = vmatpush.bf16.msra.mxu0 0
        %711 = vmatpush.bf16.msra.mxu0 %v702
        %712 = vmatpush.bf16.msra.mxu0 %v701
        %713 = vmatmul.bf16.gmra.mxu0 %v678
        %v714 = vpop.f32.mrf.mxu0
        %v715 = vadd.f32 0.0, %v714
        %v716 = vpop.f32.mrf.mxu0
        %717 = vdwg.mxu0
        %v722 = vunpack.c.l.b16 %v657
        %v723 = vunpack.c.l.b16 %v658
        %v724 = vunpack.c.l.b16 %v659
        %v725 = vunpack.c.l.b16 %v660
        %v726 = vpack.c.b16 %v723, %v722
        %v727 = vpack.c.b16 %v725, %v724
        %730 = vmatpush.bf16.msra.mxu0 0
        %731 = vmatpush.bf16.msra.mxu0 0
        %732 = vmatpush.bf16.msra.mxu0 0
        %733 = vmatpush.bf16.msra.mxu0 0
        %734 = vmatpush.bf16.msra.mxu0 0
        %735 = vmatpush.bf16.msra.mxu0 0
        %736 = vmatpush.bf16.msra.mxu0 %v727
        %737 = vmatpush.bf16.msra.mxu0 %v726
        %738 = vmatmul.bf16.gmra.mxu0 %v678
        %v739 = vpop.f32.mrf.mxu0
        %v740 = vadd.f32 0.0, %v739
        %v741 = vpop.f32.mrf.mxu0
        %742 = vdwg.mxu0
        %v747 = vunpack.c.l.b16 %v661
        %v748 = vunpack.c.l.b16 %v662
        %v749 = vunpack.c.l.b16 %v663
        %v750 = vunpack.c.l.b16 %v664
        %v751 = vpack.c.b16 %v748, %v747
        %v752 = vpack.c.b16 %v750, %v749
        %755 = vmatpush.bf16.msra.mxu0 0
        %756 = vmatpush.bf16.msra.mxu0 0
        %757 = vmatpush.bf16.msra.mxu0 0
        %758 = vmatpush.bf16.msra.mxu0 0
        %759 = vmatpush.bf16.msra.mxu0 0
        %760 = vmatpush.bf16.msra.mxu0 0
        %761 = vmatpush.bf16.msra.mxu0 %v752
        %762 = vmatpush.bf16.msra.mxu0 %v751
        %763 = vmatmul.bf16.gmra.mxu0 %v678
        %v764 = vpop.f32.mrf.mxu0
        %v765 = vadd.f32 0.0, %v764
        %v766 = vpop.f32.mrf.mxu0
        %767 = vdwg.mxu0
        %v768 = vpack.c.bf16 %v690, %v690
        %v769 = vpack.c.bf16 %v715, %v715
        %v770 = vpack.c.bf16 %v740, %v740
        %v771 = vpack.c.bf16 %v765, %v765
        %v772 = vld [vmem:[%s573] sm:$0xf]
        %v773 = vld [vmem:[%s573 + $0x4] sm:$0xf]
        %v774 = vld [vmem:[%s573 + $0x8] sm:$0xf]
        %v775 = vld [vmem:[%s573 + $0xc] sm:$0xf]
        %vm776 = vcmask 64512
        %v778 = vsel %vm776, %v768, 0
        %780 = vmatpush.bf16.xpose.msra.mxu0 0
        %781 = vmatpush.bf16.xpose.msra.mxu0 0
        %782 = vmatpush.bf16.xpose.msra.mxu0 0
        %783 = vmatpush.bf16.xpose.msra.mxu0 0
        %784 = vmatpush.bf16.xpose.msra.mxu0 0
        %785 = vmatpush.bf16.xpose.msra.mxu0 0
        %786 = vmatpush.bf16.xpose.msra.mxu0 0
        %787 = vmatpush.bf16.xpose.msra.mxu0 %v778
        %788 = vmatmul.bf16.gmra.mxu0 %v778
        %v789 = vpop.f32.mrf.mxu0
        %v790 = vadd.f32 0.0, %v789
        %v791 = vpop.f32.mrf.mxu0
        %792 = vdwg.mxu0
        %v794 = vsel %vm776, %v769, 0
        %796 = vmatpush.bf16.xpose.msra.mxu0 0
        %797 = vmatpush.bf16.xpose.msra.mxu0 0
        %798 = vmatpush.bf16.xpose.msra.mxu0 0
        %799 = vmatpush.bf16.xpose.msra.mxu0 0
        %800 = vmatpush.bf16.xpose.msra.mxu0 0
        %801 = vmatpush.bf16.xpose.msra.mxu0 0
        %802 = vmatpush.bf16.xpose.msra.mxu0 0
        %803 = vmatpush.bf16.xpose.msra.mxu0 %v794
        %804 = vmatmul.bf16.gmra.mxu0 %v794
        %v805 = vpop.f32.mrf.mxu0
        %v806 = vadd.f32 0.0, %v805
        %v807 = vpop.f32.mrf.mxu0
        %808 = vdwg.mxu0
        %v810 = vsel %vm776, %v770, 0
        %812 = vmatpush.bf16.xpose.msra.mxu0 0
        %813 = vmatpush.bf16.xpose.msra.mxu0 0
        %814 = vmatpush.bf16.xpose.msra.mxu0 0
        %815 = vmatpush.bf16.xpose.msra.mxu0 0
        %816 = vmatpush.bf16.xpose.msra.mxu0 0
        %817 = vmatpush.bf16.xpose.msra.mxu0 0
        %818 = vmatpush.bf16.xpose.msra.mxu0 0
        %819 = vmatpush.bf16.xpose.msra.mxu0 %v810
        %820 = vmatmul.bf16.gmra.mxu0 %v810
        %v821 = vpop.f32.mrf.mxu0
        %v822 = vadd.f32 0.0, %v821
        %v823 = vpop.f32.mrf.mxu0
        %824 = vdwg.mxu0
        %v826 = vsel %vm776, %v771, 0
        %828 = vmatpush.bf16.xpose.msra.mxu0 0
        %829 = vmatpush.bf16.xpose.msra.mxu0 0
        %830 = vmatpush.bf16.xpose.msra.mxu0 0
        %831 = vmatpush.bf16.xpose.msra.mxu0 0
        %832 = vmatpush.bf16.xpose.msra.mxu0 0
        %833 = vmatpush.bf16.xpose.msra.mxu0 0
        %834 = vmatpush.bf16.xpose.msra.mxu0 0
        %835 = vmatpush.bf16.xpose.msra.mxu0 %v826
        %836 = vmatmul.bf16.gmra.mxu0 %v826
        %v837 = vpop.f32.mrf.mxu0
        %v838 = vadd.f32 0.0, %v837
        %v839 = vpop.f32.mrf.mxu0
        %840 = vdwg.mxu0
        %v841 = vmul.f32 %v790, 0.17677669
        %v842 = vmul.f32 %v806, 0.17677669
        %v843 = vmul.f32 %v822, 0.17677669
        %v844 = vmul.f32 %v838, 0.17677669
        %v845 = vlaneseq
        %v846 = vshrl.u32 %v845, 7
        %v847 = vlaneseq
        %v848 = vand.u32 %v847, 127
        %vm849 = vcmp.ge.s32.totalorder %v846, %v848
        %v850 = vsel %vm849, 0.0, -1e+30
        %v851 = vadd.f32 %v841, %v850
        %v852 = vadd.f32 %v842, %v850
        %v853 = vadd.f32 %v843, %v850
        %v854 = vadd.f32 %v844, %v850
        %v855 = vsel %vm776, %v851, -inf
        %856 = vmax.xlane.f32.xlu0 %v855
        %v857 = vpop.xlane.xlu0 %856
        %v858 = vsel %vm776, %v852, -inf
        %859 = vmax.xlane.f32.xlu0 %v858
        %v860 = vpop.xlane.xlu0 %859
        %v861 = vsel %vm776, %v853, -inf
        %862 = vmax.xlane.f32.xlu0 %v861
        %v863 = vpop.xlane.xlu0 %862
        %v864 = vsel %vm776, %v854, -inf
        %865 = vmax.xlane.f32.xlu0 %v864
        %v866 = vpop.xlane.xlu0 %865
        %v867 = vsub.f32 %v851, %v857
        %v868 = vsub.f32 %v852, %v860
        %v869 = vsub.f32 %v853, %v863
        %v870 = vsub.f32 %v854, %v866
        %v871 = vmul.f32 %v867, 1.442695
        %v872 = vpow.pop %v871
        %v873 = vmul.f32 %v868, 1.442695
        %v874 = vpow.pop %v873
        %v875 = vmul.f32 %v869, 1.442695
        %v876 = vpow.pop %v875
        %v877 = vmul.f32 %v870, 1.442695
        %v878 = vpow.pop %v877
        %v879 = vsel %vm776, %v872, 0.0
        %880 = vadd.xlane.f32.xlu0 %v879
        %v881 = vpop.xlane.xlu0 %880
        %v882 = vsel %vm776, %v874, 0.0
        %883 = vadd.xlane.f32.xlu0 %v882
        %v884 = vpop.xlane.xlu0 %883
        %v885 = vsel %vm776, %v876, 0.0
        %886 = vadd.xlane.f32.xlu0 %v885
        %v887 = vpop.xlane.xlu0 %886
        %v888 = vsel %vm776, %v878, 0.0
        %889 = vadd.xlane.f32.xlu0 %v888
        %v890 = vpop.xlane.xlu0 %889
        %v891 = vrcp.pop %v881
        %v892 = vmul.f32 %v881, %v891
        %v893 = vsub.f32 1.0, %v892
        %v894 = vmul.f32 %v891, %v893
        %v895 = vadd.f32 %v891, %v894
        %vm896 = vweird.f32 %v881
        %vm897 = vweird.f32 %v891
        %vm898 = vmor %vm896, %vm897
        %v899 = vsel %vm898, %v891, %v895
        %v900 = vand.u32 2147483647, %v881
        %vm901 = vcmp.eq.f32.partialorder %v900, 8.507059e+37
        %v902 = vand.u32 %v881, 2147483648
        %v903 = vor.u32 1.1754944e-38, %v902
        %v904 = vsel %vm901, %v903, %v899
        %v905 = vmul.f32 %v872, %v904
        %v906 = vrcp.pop %v884
        %v907 = vmul.f32 %v884, %v906
        %v908 = vsub.f32 1.0, %v907
        %v909 = vmul.f32 %v906, %v908
        %v910 = vadd.f32 %v906, %v909
        %vm911 = vweird.f32 %v884
        %vm912 = vweird.f32 %v906
        %vm913 = vmor %vm911, %vm912
        %v914 = vsel %vm913, %v906, %v910
        %v915 = vand.u32 2147483647, %v884
        %vm916 = vcmp.eq.f32.partialorder %v915, 8.507059e+37
        %v917 = vand.u32 %v884, 2147483648
        %v918 = vor.u32 1.1754944e-38, %v917
        %v919 = vsel %vm916, %v918, %v914
        %v920 = vmul.f32 %v874, %v919
        %v921 = vrcp.pop %v887
        %v922 = vmul.f32 %v887, %v921
        %v923 = vsub.f32 1.0, %v922
        %v924 = vmul.f32 %v921, %v923
        %v925 = vadd.f32 %v921, %v924
        %vm926 = vweird.f32 %v887
        %vm927 = vweird.f32 %v921
        %vm928 = vmor %vm926, %vm927
        %v929 = vsel %vm928, %v921, %v925
        %v930 = vand.u32 2147483647, %v887
        %vm931 = vcmp.eq.f32.partialorder %v930, 8.507059e+37
        %v932 = vand.u32 %v887, 2147483648
        %v933 = vor.u32 1.1754944e-38, %v932
        %v934 = vsel %vm931, %v933, %v929
        %v935 = vmul.f32 %v876, %v934
        %v936 = vrcp.pop %v890
        %v937 = vmul.f32 %v890, %v936
        %v938 = vsub.f32 1.0, %v937
        %v939 = vmul.f32 %v936, %v938
        %v940 = vadd.f32 %v936, %v939
        %vm941 = vweird.f32 %v890
        %vm942 = vweird.f32 %v936
        %vm943 = vmor %vm941, %vm942
        %v944 = vsel %vm943, %v936, %v940
        %v945 = vand.u32 2147483647, %v890
        %vm946 = vcmp.eq.f32.partialorder %v945, 8.507059e+37
        %v947 = vand.u32 %v890, 2147483648
        %v948 = vor.u32 1.1754944e-38, %v947
        %v949 = vsel %vm946, %v948, %v944
        %v950 = vmul.f32 %v878, %v949
        %v951 = vpack.c.bf16 %v905, %v905
        %v952 = vpack.c.bf16 %v920, %v920
        %v953 = vpack.c.bf16 %v935, %v935
        %v954 = vpack.c.bf16 %v950, %v950
        %v956 = vsel %vm776, %v951, 0
        %vm958 = vcmask 1043456
        %v959 = vsel %vm958, %v768, 0
        %961 = vmatpush.bf16.msra.mxu0 0
        %962 = vmatpush.bf16.msra.mxu0 0
        %963 = vmatpush.bf16.msra.mxu0 0
        %964 = vmatpush.bf16.msra.mxu0 0
        %965 = vmatpush.bf16.msra.mxu0 0
        %966 = vmatpush.bf16.msra.mxu0 0
        %967 = vmatpush.bf16.msra.mxu0 0
        %968 = vmatpush.bf16.msra.mxu0 %v959
        %969 = vmatmul.bf16.gmra.mxu0 %v956
        %v970 = vpop.f32.mrf.mxu0
        %v971 = vadd.f32 0.0, %v970
        %v972 = vpop.f32.mrf.mxu0
        %973 = vdwg.mxu0
        %v975 = vsel %vm776, %v952, 0
        %v977 = vsel %vm958, %v769, 0
        %979 = vmatpush.bf16.msra.mxu0 0
        %980 = vmatpush.bf16.msra.mxu0 0
        %981 = vmatpush.bf16.msra.mxu0 0
        %982 = vmatpush.bf16.msra.mxu0 0
        %983 = vmatpush.bf16.msra.mxu0 0
        %984 = vmatpush.bf16.msra.mxu0 0
        %985 = vmatpush.bf16.msra.mxu0 0
        %986 = vmatpush.bf16.msra.mxu0 %v977
        %987 = vmatmul.bf16.gmra.mxu0 %v975
        %v988 = vpop.f32.mrf.mxu0
        %v989 = vadd.f32 0.0, %v988
        %v990 = vpop.f32.mrf.mxu0
        %991 = vdwg.mxu0
        %v993 = vsel %vm776, %v953, 0
        %v995 = vsel %vm958, %v770, 0
        %997 = vmatpush.bf16.msra.mxu0 0
        %998 = vmatpush.bf16.msra.mxu0 0
        %999 = vmatpush.bf16.msra.mxu0 0
        %1000 = vmatpush.bf16.msra.mxu0 0
        %1001 = vmatpush.bf16.msra.mxu0 0
        %1002 = vmatpush.bf16.msra.mxu0 0
        %1003 = vmatpush.bf16.msra.mxu0 0
        %1004 = vmatpush.bf16.msra.mxu0 %v995
        %1005 = vmatmul.bf16.gmra.mxu0 %v993
        %v1006 = vpop.f32.mrf.mxu0
        %v1007 = vadd.f32 0.0, %v1006
        %v1008 = vpop.f32.mrf.mxu0
        %1009 = vdwg.mxu0
        %v1011 = vsel %vm776, %v954, 0
        %v1013 = vsel %vm958, %v771, 0
        %1015 = vmatpush.bf16.msra.mxu0 0
        %1016 = vmatpush.bf16.msra.mxu0 0
        %1017 = vmatpush.bf16.msra.mxu0 0
        %1018 = vmatpush.bf16.msra.mxu0 0
        %1019 = vmatpush.bf16.msra.mxu0 0
        %1020 = vmatpush.bf16.msra.mxu0 0
        %1021 = vmatpush.bf16.msra.mxu0 0
        %1022 = vmatpush.bf16.msra.mxu0 %v1013
        %1023 = vmatmul.bf16.gmra.mxu0 %v1011
        %v1024 = vpop.f32.mrf.mxu0
        %v1025 = vadd.f32 0.0, %v1024
        %v1026 = vpop.f32.mrf.mxu0
        %1027 = vdwg.mxu0
        %v1028 = vpack.c.bf16 %v971, %v971
        %v1029 = vpack.c.bf16 %v989, %v989
        %v1030 = vpack.c.bf16 %v1007, %v1007
        %v1031 = vpack.c.bf16 %v1025, %v1025
        %v1033 = vsel %vm776, %v1028, 0
        %v1036 = vsel %vm958, %v772, 0
        %1038 = vmatpush.bf16.msra.mxu0 0
        %1039 = vmatpush.bf16.msra.mxu0 0
        %1040 = vmatpush.bf16.msra.mxu0 0
        %1041 = vmatpush.bf16.msra.mxu0 0
        %1042 = vmatpush.bf16.msra.mxu0 0
        %1043 = vmatpush.bf16.msra.mxu0 0
        %1044 = vmatpush.bf16.msra.mxu0 0
        %1045 = vmatpush.bf16.msra.mxu0 %v1036
        %1046 = vmatmul.bf16.gmra.mxu0 %v1033
        %v1047 = vpop.f32.mrf.mxu0
        %v1048 = vadd.f32 0.0, %v1047
        %v1049 = vpop.f32.mrf.mxu0
        %1050 = vdwg.mxu0
        %v1052 = vsel %vm776, %v1029, 0
        %v1055 = vsel %vm958, %v773, 0
        %1057 = vmatpush.bf16.msra.mxu0 0
        %1058 = vmatpush.bf16.msra.mxu0 0
        %1059 = vmatpush.bf16.msra.mxu0 0
        %1060 = vmatpush.bf16.msra.mxu0 0
        %1061 = vmatpush.bf16.msra.mxu0 0
        %1062 = vmatpush.bf16.msra.mxu0 0
        %1063 = vmatpush.bf16.msra.mxu0 0
        %1064 = vmatpush.bf16.msra.mxu0 %v1055
        %1065 = vmatmul.bf16.gmra.mxu0 %v1052
        %v1066 = vpop.f32.mrf.mxu0
        %v1067 = vadd.f32 0.0, %v1066
        %v1068 = vpop.f32.mrf.mxu0
        %1069 = vdwg.mxu0
        %v1071 = vsel %vm776, %v1030, 0
        %v1074 = vsel %vm958, %v774, 0
        %1076 = vmatpush.bf16.msra.mxu0 0
        %1077 = vmatpush.bf16.msra.mxu0 0
        %1078 = vmatpush.bf16.msra.mxu0 0
        %1079 = vmatpush.bf16.msra.mxu0 0
        %1080 = vmatpush.bf16.msra.mxu0 0
        %1081 = vmatpush.bf16.msra.mxu0 0
        %1082 = vmatpush.bf16.msra.mxu0 0
        %1083 = vmatpush.bf16.msra.mxu0 %v1074
        %1084 = vmatmul.bf16.gmra.mxu0 %v1071
        %v1085 = vpop.f32.mrf.mxu0
        %v1086 = vadd.f32 0.0, %v1085
        %v1087 = vpop.f32.mrf.mxu0
        %1088 = vdwg.mxu0
        %v1090 = vsel %vm776, %v1031, 0
        %v1093 = vsel %vm958, %v775, 0
        %1095 = vmatpush.bf16.msra.mxu0 0
        %1096 = vmatpush.bf16.msra.mxu0 0
        %1097 = vmatpush.bf16.msra.mxu0 0
        %1098 = vmatpush.bf16.msra.mxu0 0
        %1099 = vmatpush.bf16.msra.mxu0 0
        %1100 = vmatpush.bf16.msra.mxu0 0
        %1101 = vmatpush.bf16.msra.mxu0 0
        %1102 = vmatpush.bf16.msra.mxu0 %v1093
        %1103 = vmatmul.bf16.gmra.mxu0 %v1090
        %v1104 = vpop.f32.mrf.mxu0
        %v1105 = vadd.f32 0.0, %v1104
        %v1106 = vpop.f32.mrf.mxu0
        %1107 = vdwg.mxu0
        %v1108 = vsel %vm610, %v1048, 0.0
        %v1109 = vsel %vm610, %v1067, 0.0
        %v1110 = vadd.f32 %v1108, %v1109
        %v1111 = vsel %vm610, %v1086, 0.0
        %v1112 = vadd.f32 %v1110, %v1111
        %v1113 = vsel %vm610, %v1105, 0.0
        %v1114 = vadd.f32 %v1112, %v1113
        %v1115 = vadd.f32 %v607, %v1114
        %v1116 = vld [vmem:[%s576] sm:$0x1]
        %v1118 = vperm.slane %v1116, 0
        %v1120 = vadd.f32 %v1115, %v1118
        %v1121 = vld [vmem:[%s579] sm:$0x1]
        %v1122 = vld [vmem:[%s582] sm:$0x1]
        %v1123 = vsel %vm610, %v1120, 0.0
        %1124 = vadd.xlane.f32.xlu0 %v1123
        %v1125 = vpop.xlane.xlu0 %1124
        %v1126 = vmul.f32 %v1125, %v620
        %v1127 = vsub.f32 %v1120, %v1126
        %v1128 = vmul.f32 %v1127, %v1127
        %v1129 = vsel %vm610, %v1128, 0.0
        %1130 = vadd.xlane.f32.xlu0 %v1129
        %v1131 = vpop.xlane.xlu0 %1130
        %v1132 = vmul.f32 %v1131, %v620
        %v1133 = vadd.f32 %v1132, 1e-05
        %v1134 = vrsqrt.pop %v1133
        %v1135 = vmul.f32 %v1134, %v1133
        %v1136 = vmul.f32 %v1135, %v1134
        %v1137 = vmul.f32 0.5, %v1136
        %v1138 = vsub.f32 1.5, %v1137
        %v1139 = vmul.f32 %v1134, %v1138
        %vm1140 = vweird.f32 %v1133
        %vm1141 = vweird.f32 %v1134
        %vm1142 = vmor %vm1140, %vm1141
        %v1143 = vsel %vm1142, %v1134, %v1139
        %v1144 = vmul.f32 %v1127, %v1143
        %v1146 = vperm.slane %v1121, 0
        %v1148 = vmul.f32 %v1144, %v1146
        %v1150 = vperm.slane %v1122, 0
        %v1152 = vadd.f32 %v1148, %v1150
        %v1153 = vpack.c.bf16 %v1152, %v1152
        %v1154 = vld [vmem:[%s587] sm:$0xf]
        %v1155 = vld [vmem:[%s587 + $0x4] sm:$0xf]
        %v1156 = vld [vmem:[%s587 + $0x8] sm:$0xf]
        %v1157 = vld [vmem:[%s587 + $0xc] sm:$0xf]
        %v1158 = vld [vmem:[%s590] sm:$0x1]
        %v1160 = vperm.slane %v1158, 0
        %v1166 = vunpack.c.l.b16 %v1154
        %v1167 = vunpack.c.l.b16 %v1155
        %v1168 = vunpack.c.l.b16 %v1156
        %v1169 = vunpack.c.l.b16 %v1157
        %v1170 = vpack.c.b16 %v1167, %v1166
        %v1171 = vpack.c.b16 %v1169, %v1168
        %v1175 = vsel %vm610, %v1153, 0
        %1177 = vmatpush.bf16.msra.mxu0 0
        %1178 = vmatpush.bf16.msra.mxu0 0
        %1179 = vmatpush.bf16.msra.mxu0 0
        %1180 = vmatpush.bf16.msra.mxu0 0
        %1181 = vmatpush.bf16.msra.mxu0 0
        %1182 = vmatpush.bf16.msra.mxu0 0
        %1183 = vmatpush.bf16.msra.mxu0 %v1171
        %1184 = vmatpush.bf16.msra.mxu0 %v1170
        %1185 = vmatmul.bf16.gmra.mxu0 %v1175
        %v1186 = vpop.f32.mrf.mxu0
        %v1187 = vadd.f32 %v1160, %v1186
        %v1188 = vpop.f32.mrf.mxu0
        %1189 = vdwg.mxu0
        %v1190 = vmax.f32 %v1187, 0.0
        %v1191 = vpack.c.bf16 %v1190, %v1190
        %v1192 = vld [vmem:[%s595] sm:$0xf]
        %v1193 = vld [vmem:[%s595 + $0x4] sm:$0xf]
        %v1194 = vld [vmem:[%s595 + $0x8] sm:$0xf]
        %v1195 = vld [vmem:[%s595 + $0xc] sm:$0xf]
        %v1196 = vld [vmem:[%s595 + $0x10] sm:$0xf]
        %v1197 = vld [vmem:[%s595 + $0x14] sm:$0xf]
        %v1198 = vld [vmem:[%s595 + $0x18] sm:$0xf]
        %v1199 = vld [vmem:[%s595 + $0x1c] sm:$0xf]
        %v1200 = vld [vmem:[%s595 + $0x20] sm:$0xf]
        %v1201 = vld [vmem:[%s595 + $0x24] sm:$0xf]
        %v1202 = vld [vmem:[%s595 + $0x28] sm:$0xf]
        %v1203 = vld [vmem:[%s595 + $0x2c] sm:$0xf]
        %v1204 = vld [vmem:[%s595 + $0x30] sm:$0xf]
        %v1205 = vld [vmem:[%s595 + $0x34] sm:$0xf]
        %v1206 = vld [vmem:[%s595 + $0x38] sm:$0xf]
        %v1207 = vld [vmem:[%s595 + $0x3c] sm:$0xf]
        %v1224 = vunpack.c.l.b16 %v1192
        %v1225 = vunpack.c.l.b16 %v1193
        %v1226 = vunpack.c.l.b16 %v1194
        %v1227 = vunpack.c.l.b16 %v1195
        %v1228 = vunpack.c.l.b16 %v1196
        %v1229 = vunpack.c.l.b16 %v1197
        %v1230 = vunpack.c.l.b16 %v1198
        %v1231 = vunpack.c.l.b16 %v1199
        %v1232 = vunpack.c.l.b16 %v1200
        %v1233 = vunpack.c.l.b16 %v1201
        %v1234 = vunpack.c.l.b16 %v1202
        %v1235 = vunpack.c.l.b16 %v1203
        %v1236 = vunpack.c.l.b16 %v1204
        %v1237 = vunpack.c.l.b16 %v1205
        %v1238 = vunpack.c.l.b16 %v1206
        %v1239 = vunpack.c.l.b16 %v1207
        %v1240 = vpack.c.b16 %v1225, %v1224
        %v1241 = vpack.c.b16 %v1227, %v1226
        %v1242 = vpack.c.b16 %v1229, %v1228
        %v1243 = vpack.c.b16 %v1231, %v1230
        %v1244 = vpack.c.b16 %v1233, %v1232
        %v1245 = vpack.c.b16 %v1235, %v1234
        %v1246 = vpack.c.b16 %v1237, %v1236
        %v1247 = vpack.c.b16 %v1239, %v1238
        %1256 = vmatpush.bf16.msra.mxu0 %v1247
        %1257 = vmatpush.bf16.msra.mxu0 %v1246
        %1258 = vmatpush.bf16.msra.mxu0 %v1245
        %1259 = vmatpush.bf16.msra.mxu0 %v1244
        %1260 = vmatpush.bf16.msra.mxu0 %v1243
        %1261 = vmatpush.bf16.msra.mxu0 %v1242
        %1262 = vmatpush.bf16.msra.mxu0 %v1241
        %1263 = vmatpush.bf16.msra.mxu0 %v1240
        %1264 = vmatmul.bf16.gmra.mxu0 %v1191
        %v1265 = vpop.f32.mrf.mxu0
        %v1266 = vadd.f32 0.0, %v1265
        %v1267 = vpop.f32.mrf.mxu0
        %1268 = vdwg.mxu0
        %v1269 = vadd.f32 %v1120, %v1266
        %v1270 = vld [vmem:[%s598] sm:$0x1]
        %v1272 = vperm.slane %v1270, 0
        %v1274 = vadd.f32 %v1269, %v1272
        %1275 = vst.msk [vmem:[%s553] sm:$0xff] %vm610, %v1274
        %s1276 = sand.u32 %s358, 1
        %s1277 = scalar_lea.sflag [#allocation3], %s1276
        %s1278 = sand.u32 %s358, 1
        %s1279 = smul.addr %s1278, 8
        %s1280 = scalar_lea.vmem [#allocation2], %s1279
        // Predicated region
        $region73: #{tpu_custom_call.1} parent=67 // pred_check
          %p1281 = pneg %p368
        $region74: #{tpu_custom_call.1} parent=67 // pred_check_branch
          %1283 = sbr.rel (%p1281) target = $region76
        $region75: #{tpu_custom_call.1} parent=67 // pred_region
          %1285 = vsyncadd %s1277, 0
          %s1286 = smul.addr %s30, 8
          %s1287 = scalar_lea.hbm %s12, %s1286
          %s1289 = sshll.u32 %s1280, 4
          %s1290 = int_to_ptr.vmem [resolvable:$true] %s1289
          %s1291 = sshll.u32 %s1287, 4
          %s1292 = int_to_ptr.hbm [resolvable:$true] %s1291
          %1294 = dma.vmem_to_hbm [thread:$0]  %s1290, 128, %s1292, %s1277
        $region76: #{tpu_custom_call.1} parent=67 // pred_fallthru
          _
      $region68: #{tpu_custom_call.1} parent=5 // pred_fallthru
        _
      %p1295 = scmp.le.s32.totalorder 2, %s21
      // Predicated region
      $region77: #{tpu_custom_call.1} parent=5 // pred_check
        %p1296 = pneg %p1295
      $region78: #{tpu_custom_call.1} parent=5 // pred_check_branch
        %1298 = sbr.rel (%p1296) target = $region80
      $region79: #{tpu_custom_call.1} parent=5 // pred_region
        %s1299 = ssub.s32 %s21, 2
        // Predicated region
        $region81: #{tpu_custom_call.1} parent=79 // pred_check
          %p1300 = pneg %p374
        $region82: #{tpu_custom_call.1} parent=79 // pred_check_branch
          %1302 = sbr.rel (%p1300) target = $region84
        $region83: #{tpu_custom_call.1} parent=79 // pred_region
          %s1303 = sand.u32 %s359, 1
          %s1304 = scalar_lea.sflag [#allocation3], %s1303
          %s1305 = sand.u32 %s359, 1
          %s1306 = smul.addr %s1305, 8
          %s1307 = scalar_lea.vmem [#allocation2], %s1306
          %1309 = dma.done %s1304, 128
        $region84: #{tpu_custom_call.1} parent=79 // pred_fallthru
          _
      $region80: #{tpu_custom_call.1} parent=5 // pred_fallthru
        _
    $region6: #{tpu_custom_call.1} parent=1 // loop_footer
      %s25 = sadd.s32 1, %s21
    $region7: #{tpu_custom_call.1} parent=1 // loop_footer_branch
      %20 = sbr.rel target = $region3
    $region8: #{tpu_custom_call.1} parent=1 // loop_exit
      _
    %1310 = vsyncpa [#allocation3], 1
    %s1311 = scalar_lea.sflag [#allocation3], 1
    %1312 = vsyncpa %s1311, 1

</llo_original>
